<compile_context>
chip_gen: v5e
topology: v5e:2x2
jax: 0.10.0
libtpu: 0.0.40
codegen_flags: <defaults>
</compile_context>

<pallas_src>
import jax
import jax.numpy as jnp
import numpy as np
from jax import lax
from jax.experimental import pallas as pl
from jax.experimental.pallas import tpu as pltpu


# ----------------------------------------------------------------------------
# helpers
# ----------------------------------------------------------------------------
def _round_up(n, m):
    return ((n + m - 1) // m) * m


def _pick_tile(n, cap, mult):
    """Largest divisor of n that is a multiple of `mult` and <= cap (n if n<=cap)."""
    if n <= cap:
        return n
    best = mult
    d = mult
    while d <= cap:
        if n % d == 0:
            best = d
        d += mult
    return best


def _pad_gate_rows(w, H, Hp):
    """(4H, X) gate-blocked rows [i,f,g,o] -> (4Hp, X), each gate zero-padded to Hp rows."""
    blocks = [jnp.pad(w[k * H:(k + 1) * H], ((0, Hp - H), (0, 0))) for k in range(4)]
    return jnp.concatenate(blocks, axis=0)


def _has_bf16_eup():
    """True on chips with a bf16 VPU/EUP path (v6e / v7x); False on v5e and older."""
    try:
        kind = jax.devices()[0].device_kind.lower()
    except Exception:
        return False
    return not any(tag in kind for tag in ("v2", "v3", "v4", "v5"))


# ----------------------------------------------------------------------------
# fused LSTM kernel: per-chunk input projection + chunked recurrence + final FC
# ----------------------------------------------------------------------------
def _make_lstm_kernel(T_real, act_dtype, mask_time):
    """Build the kernel closure over static config.

    Grid: (batch tiles, time chunks) with time as the trailing sequential axis.
    Kernel refs:
      x_ref   : (TT, TB, in_dim)  weight_dtype  time-major x chunk
      wih_ref : (in_dim, 4Hp)     weight_dtype  W_ih^T   (resident)
      b_ref   : (1, 4Hp) f32                    b_ih + b_hh
      whh_ref : (Hp, 4Hp)         weight_dtype  W_hh^T   (resident)
      fcw_ref : (Hp, Cp)          weight_dtype  fc.weight^T (resident)
      fcb_ref : (1, Cp) f32                     fc.bias
      out_ref : (TB, Cp) f32                    logits (written on last chunk)
      h_sc/c_sc : (TB, Hp) f32                  persistent state scratch
      gx_sc   : (TT, TB, 4Hp) f32               per-chunk x-projection scratch
    """

    def kernel(x_ref, wih_ref, b_ref, whh_ref, fcw_ref, fcb_ref,
               out_ref, h_sc, c_sc, gx_sc):
        tc = pl.program_id(1)

        @pl.when(tc == 0)
        def _():
            h_sc[...] = jnp.zeros_like(h_sc)
            c_sc[...] = jnp.zeros_like(c_sc)

        TT, TB, in_dim = x_ref.shape
        Hp = h_sc.shape[1]

        # Hoisted per-chunk x-projection: one (TT*TB, in_dim) x (in_dim, 4Hp) MXU
        # matmul (M = TT*TB keeps the MXU busy); replaces the HBM gate stream.
        xg = jnp.dot(x_ref[...].reshape(TT * TB, in_dim), wih_ref[...],
                     preferred_element_type=jnp.float32) + b_ref[...]
        gx_sc[...] = xg.reshape(TT, TB, 4 * Hp)

        def _tanh(v):
            # bf16 EUP path on v6e/v7x; exact f32 otherwise (no-op casts).
            return jnp.tanh(v.astype(act_dtype)).astype(jnp.float32)

        def _sigmoid(v):
            # tanh-form logistic: one EUP op per element instead of exp + recip.
            return 0.5 * _tanh(0.5 * v) + 0.5

        def step(i, carry):
            h, c = carry
            gates = gx_sc[i] + jnp.dot(h.astype(whh_ref.dtype), whh_ref[...],
                                       preferred_element_type=jnp.float32)
            i_g = _sigmoid(gates[:, 0 * Hp:1 * Hp])
            f_g = _sigmoid(gates[:, 1 * Hp:2 * Hp])
            g_g = _tanh(gates[:, 2 * Hp:3 * Hp])
            o_g = _sigmoid(gates[:, 3 * Hp:4 * Hp])
            c_new = f_g * c + i_g * g_g
            h_new = o_g * _tanh(c_new)
            if mask_time:
                # Tail chunk: timesteps beyond the real sequence leave h/c unchanged.
                valid = (tc * TT + i) < T_real
                h_new = jnp.where(valid, h_new, h)
                c_new = jnp.where(valid, c_new, c)
            return (h_new, c_new)

        h, c = lax.fori_loop(0, TT, step, (h_sc[...], c_sc[...]), unroll=True)
        h_sc[...] = h
        c_sc[...] = c

        # Output block index is constant across the sequential time axis; it is
        # only written on the last chunk (h of the last real timestep).
        @pl.when(tc == pl.num_programs(1) - 1)
        def _():
            logits = (jnp.dot(h.astype(fcw_ref.dtype), fcw_ref[...],
                              preferred_element_type=jnp.float32) + fcb_ref[...])
            out_ref[...] = logits.astype(out_ref.dtype)

    return kernel


# ----------------------------------------------------------------------------
# wrapper
# ----------------------------------------------------------------------------
def rnn_feature_forward(x, params, weight_dtype=jnp.bfloat16, fast_act=None):
    """x: (B, T, in_dim) float32.  Returns (B, classes) float32."""
    B, T, in_dim = x.shape
    H = params["w_hh"].shape[1]
    C = params["fc_w"].shape[0]

    Hp = _round_up(H, 128)   # lane-align each gate block
    Cp = _round_up(C, 128)   # lane-dense final store
    Bp = _round_up(B, 8)     # sublane-align batch

    weight_dtype = jnp.dtype(weight_dtype)
    wbytes = weight_dtype.itemsize
    if fast_act is None:
        fast_act = _has_bf16_eup()
    act_dtype = (jnp.bfloat16
                 if (weight_dtype == jnp.dtype(jnp.bfloat16) and fast_act)
                 else jnp.float32)

    # --- padded / transposed weights (PyTorch gate order i, f, g, o per block) ---
    wih_t = _pad_gate_rows(params["w_ih"], H, Hp).T.astype(weight_dtype)           # (in_dim, 4Hp)
    whh_t = jnp.pad(_pad_gate_rows(params["w_hh"], H, Hp),
                    ((0, 0), (0, Hp - H))).T.astype(weight_dtype)                  # (Hp, 4Hp)
    b_sum = params["b_ih"] + params["b_hh"]
    bias = jnp.concatenate(
        [jnp.pad(b_sum[k * H:(k + 1) * H], (0, Hp - H)) for k in range(4)]
    ).reshape(1, 4 * Hp).astype(jnp.float32)                                       # (1, 4Hp)
    fcw_t = jnp.pad(params["fc_w"].T, ((0, Hp - H), (0, Cp - C))).astype(weight_dtype)  # (Hp, Cp)
    fcb = jnp.pad(params["fc_b"], (0, Cp - C)).reshape(1, Cp).astype(jnp.float32)       # (1, Cp)

    # --- tile selection (VMEM-budgeted; conservative for v5e/v7x) ----------------
    TB = _pick_tile(Bp, 256, 8)                 # no forced split on single-TC chips
    GX_BUDGET = 6 << 20                         # f32 per-chunk gate scratch budget
    TT = int(max(1, min(32, T, GX_BUDGET // (TB * 4 * Hp * 4))))
    Tp = _round_up(T, TT)                       # tail timesteps masked in-kernel
    n_bt = Bp // TB
    n_tc = Tp // TT
    mask_time = (Tp != T)

    # x: pad batch/time, go time-major, cast once (single fused XLA op).
    x_tm = jnp.transpose(
        jnp.pad(x, ((0, Bp - B), (0, Tp - T), (0, 0))), (1, 0, 2)
    ).astype(weight_dtype)                                                          # (Tp, Bp, in_dim)

    # Explicit VMEM budget (double-buffered inputs/out + resident weights + scratch).
    est_vmem = (
        2 * TT * TB * in_dim * wbytes
        + 2 * (in_dim * 4 * Hp + Hp * 4 * Hp + Hp * Cp) * wbytes
        + 2 * (4 * Hp + Cp) * 4
        + 2 * TB * Cp * 4
        + 2 * TB * Hp * 4
        + TT * TB * 4 * Hp * 4
    )
    vmem_limit = int(min(48 << 20, max(32 << 20, 2 * est_vmem)))

    kernel = _make_lstm_kernel(T, act_dtype, mask_time)

    out_p = pl.pallas_call(
        kernel,
        out_shape=jax.ShapeDtypeStruct((Bp, Cp), jnp.float32),
        grid_spec=pltpu.PrefetchScalarGridSpec(
            num_scalar_prefetch=0,
            grid=(n_bt, n_tc),
            in_specs=[
                pl.BlockSpec((TT, TB, in_dim), lambda b, t: (t, b, 0)),   # x chunk
                pl.BlockSpec((in_dim, 4 * Hp), lambda b, t: (0, 0)),      # W_ih^T (resident)
                pl.BlockSpec((1, 4 * Hp), lambda b, t: (0, 0)),           # fused bias
                pl.BlockSpec((Hp, 4 * Hp), lambda b, t: (0, 0)),          # W_hh^T (resident)
                pl.BlockSpec((Hp, Cp), lambda b, t: (0, 0)),              # fc W^T (resident)
                pl.BlockSpec((1, Cp), lambda b, t: (0, 0)),               # fc bias
            ],
            out_specs=pl.BlockSpec((TB, Cp), lambda b, t: (b, 0)),
            scratch_shapes=[
                pltpu.VMEM((TB, Hp), jnp.float32),            # h state
                pltpu.VMEM((TB, Hp), jnp.float32),            # c state
                pltpu.VMEM((TT, TB, 4 * Hp), jnp.float32),    # per-chunk gate projection
            ],
        ),
        compiler_params=pltpu.CompilerParams(
            dimension_semantics=("parallel", "arbitrary"),   # batch parallel, time sequential
            vmem_limit_bytes=vmem_limit),
    )(x_tm, wih_t, bias, whh_t, fcw_t, fcb)

    return out_p[:B, :C]


# ----------------------------------------------------------------------------
# init + pure-JAX reference (PyTorch semantics) for validation
# ----------------------------------------------------------------------------
def init_params(key, in_dim, hidden_dim, classes):
    """Deterministic init matching nn.LSTM / nn.Linear parameter shapes."""
    k = jax.random.split(key, 6)
    s = 1.0 / np.sqrt(hidden_dim)
    u = lambda kk, shape: jax.random.uniform(kk, shape, jnp.float32, -s, s)
    return {
        "w_ih": u(k[0], (4 * hidden_dim, in_dim)),
        "w_hh": u(k[1], (4 * hidden_dim, hidden_dim)),
        "b_ih": u(k[2], (4 * hidden_dim,)),
        "b_hh": u(k[3], (4 * hidden_dim,)),
        "fc_w": u(k[4], (classes, hidden_dim)),
        "fc_b": u(k[5], (classes,)),
    }


def rnn_feature_reference(x, params):
    B, T, _ = x.shape
    H = params["w_hh"].shape[1]
    wih_t = params["w_ih"].T
    whh_t = params["w_hh"].T
    b = params["b_ih"] + params["b_hh"]

    def step(carry, x_t):
        h, c = carry
        gates = x_t @ wih_t + h @ whh_t + b
        i = jax.nn.sigmoid(gates[:, 0 * H:1 * H])
        f = jax.nn.sigmoid(gates[:, 1 * H:2 * H])
        g = jnp.tanh(gates[:, 2 * H:3 * H])
        o = jax.nn.sigmoid(gates[:, 3 * H:4 * H])
        c = f * c + i * g
        h = o * jnp.tanh(c)
        return (h, c), None

    h0 = jnp.zeros((B, H), jnp.float32)
    c0 = jnp.zeros((B, H), jnp.float32)
    (h_last, _), _ = lax.scan(step, (h0, c0), jnp.transpose(x, (1, 0, 2)))
    return h_last @ params["fc_w"].T + params["fc_b"]


if __name__ == "__main__":
    key = jax.random.PRNGKey(0)

    def run_case(case_key, B, T, in_dim, hidden, classes, bf16_tol):
        kx, kp = jax.random.split(case_key)
        x = jax.random.normal(kx, (B, T, in_dim), jnp.float32)
        params = init_params(kp, in_dim, hidden, classes)
        ref = rnn_feature_reference(x, params)

        # Exact-precision path (f32 end-to-end) — tight tolerance.
        out_f32 = jax.block_until_ready(
            rnn_feature_forward(x, params, weight_dtype=jnp.float32))
        np.testing.assert_allclose(np.asarray(out_f32), np.asarray(ref),
                                   rtol=1e-4, atol=1e-4)

        # Fast path (bf16 weights on the MXU, f32 accumulation / f32 state).
        out_bf16 = jax.block_until_ready(
            rnn_feature_forward(x, params, weight_dtype=jnp.bfloat16))
        np.testing.assert_allclose(np.asarray(out_bf16), np.asarray(ref),
                                   rtol=bf16_tol, atol=bf16_tol)

    k1, k2 = jax.random.split(key)
    # Small shape implied by the module: batch=2, seq=8, in_dim=16, hidden=32, classes=4.
    run_case(k1, 2, 8, 16, 32, 4, 5e-2)
    # Larger shape: multiple time chunks, tail-timestep masking (T=45), gate-block
    # padding (H=160 -> Hp=256), class padding, batch padding.
    run_case(k2, 4, 45, 24, 160, 7, 6e-2)

    print("KERNEL_OK")
</pallas_src>

<mosaic_0001>
module attributes {stable_mosaic.version = 11 : i64} {
  func.func @kernel(%arg0: i32, %arg1: i32, %arg2: memref<8x8x16xf32, #tpu.memory_space<vmem>>, %arg3: memref<16x512xf32, #tpu.memory_space<vmem>>, %arg4: memref<1x512xf32, #tpu.memory_space<vmem>>, %arg5: memref<128x512xf32, #tpu.memory_space<vmem>>, %arg6: memref<128x128xf32, #tpu.memory_space<vmem>>, %arg7: memref<1x128xf32, #tpu.memory_space<vmem>>, %arg8: memref<8x128xf32, #tpu.memory_space<vmem>>, %arg9: memref<8x128xf32, #tpu.memory_space<vmem>>, %arg10: memref<8x128xf32, #tpu.memory_space<vmem>>, %arg11: memref<8x8x512xf32, #tpu.memory_space<vmem>>) attributes {dimension_semantics = [#tpu.dimension_semantics<parallel>, #tpu.dimension_semantics<arbitrary>], iteration_bounds = array<i64: 1, 1>, scalar_prefetch = 0 : i64, scratch_operands = 3 : i64, tpu.core_type = #tpu.core_type<tc>, window_params = [{transform_indices = @transform_0, window_bounds = array<i64: 8, 8, 16>}, {pipeline_mode = #tpu.pipeline_mode<synchronous>, transform_indices = @transform_1, window_bounds = array<i64: 16, 512>}, {pipeline_mode = #tpu.pipeline_mode<synchronous>, transform_indices = @transform_2, window_bounds = array<i64: 1, 512>}, {pipeline_mode = #tpu.pipeline_mode<synchronous>, transform_indices = @transform_3, window_bounds = array<i64: 128, 512>}, {pipeline_mode = #tpu.pipeline_mode<synchronous>, transform_indices = @transform_4, window_bounds = array<i64: 128, 128>}, {pipeline_mode = #tpu.pipeline_mode<synchronous>, transform_indices = @transform_5, window_bounds = array<i64: 1, 128>}, {transform_indices = @transform_6, window_bounds = array<i64: 8, 128>}]} {
    %c0_i32 = arith.constant 0 : i32
    %0 = arith.cmpi eq, %arg1, %c0_i32 : i32
    %1 = arith.extui %0 : i1 to i32
    %c0_i32_0 = arith.constant 0 : i32
    %2 = arith.cmpi ne, %1, %c0_i32_0 : i32
    scf.if %2 {
      %cst_133 = arith.constant 0.000000e+00 : f32
      %315 = vector.broadcast %cst_133 : f32 to vector<8x128xf32>
      %c0_134 = arith.constant 0 : index
      %c0_135 = arith.constant 0 : index
      %316 = vector.load %arg9[%c0_134, %c0_135] : memref<8x128xf32, #tpu.memory_space<vmem>>, vector<8x128xf32>
      tpu.vector_store %arg9[%c0_134, %c0_135], %315 {strides = array<i32>} : memref<8x128xf32, #tpu.memory_space<vmem>>, vector<8x128xf32>,
      %cst_136 = arith.constant 0.000000e+00 : f32
      %317 = vector.broadcast %cst_136 : f32 to vector<8x128xf32>
      %c0_137 = arith.constant 0 : index
      %c0_138 = arith.constant 0 : index
      %318 = vector.load %arg10[%c0_137, %c0_138] : memref<8x128xf32, #tpu.memory_space<vmem>>, vector<8x128xf32>
      tpu.vector_store %arg10[%c0_137, %c0_138], %317 {strides = array<i32>} : memref<8x128xf32, #tpu.memory_space<vmem>>, vector<8x128xf32>,
    } else {
    }
    %c0 = arith.constant 0 : index
    %c0_1 = arith.constant 0 : index
    %c0_2 = arith.constant 0 : index
    %3 = vector.load %arg2[%c0, %c0_1, %c0_2] : memref<8x8x16xf32, #tpu.memory_space<vmem>>, vector<8x8x16xf32>
    %4 = vector.shape_cast %3 : vector<8x8x16xf32> to vector<64x16xf32>
    %c0_3 = arith.constant 0 : index
    %c0_4 = arith.constant 0 : index
    %5 = vector.load %arg3[%c0_3, %c0_4] : memref<16x512xf32, #tpu.memory_space<vmem>>, vector<16x512xf32>
    %cst = arith.constant dense<0.000000e+00> : vector<64x512xf32>
    %6 = tpu.matmul %4, %5, %cst {dimension_numbers = #tpu.dot_dimension_numbers<[1], [0], [0], [1], [0, 0, 1, 1], [], []>} : vector<64x16xf32>, vector<16x512xf32>, vector<64x512xf32> -> vector<64x512xf32>
    %c0_5 = arith.constant 0 : index
    %c0_6 = arith.constant 0 : index
    %7 = vector.load %arg4[%c0_5, %c0_6] : memref<1x512xf32, #tpu.memory_space<vmem>>, vector<1x512xf32>
    %8 = vector.broadcast %7 : vector<1x512xf32> to vector<64x512xf32>
    %9 = arith.addf %6, %8 : vector<64x512xf32>
    %10 = vector.shape_cast %9 : vector<64x512xf32> to vector<8x8x512xf32>
    %c0_7 = arith.constant 0 : index
    %c0_8 = arith.constant 0 : index
    %c0_9 = arith.constant 0 : index
    %11 = vector.load %arg11[%c0_7, %c0_8, %c0_9] : memref<8x8x512xf32, #tpu.memory_space<vmem>>, vector<8x8x512xf32>
    tpu.vector_store %arg11[%c0_7, %c0_8, %c0_9], %10 {strides = array<i32>} : memref<8x8x512xf32, #tpu.memory_space<vmem>>, vector<8x8x512xf32>,
    %c0_10 = arith.constant 0 : index
    %c0_11 = arith.constant 0 : index
    %12 = vector.load %arg9[%c0_10, %c0_11] : memref<8x128xf32, #tpu.memory_space<vmem>>, vector<8x128xf32>
    %c0_12 = arith.constant 0 : index
    %c0_13 = arith.constant 0 : index
    %13 = vector.load %arg10[%c0_12, %c0_13] : memref<8x128xf32, #tpu.memory_space<vmem>>, vector<8x128xf32>
    %c0_i32_14 = arith.constant 0 : i32
    %14 = arith.index_cast %c0_i32_14 : i32 to index
    %c0_15 = arith.constant 0 : index
    %c0_16 = arith.constant 0 : index
    %15 = vector.load %arg11[%14, %c0_15, %c0_16] : memref<8x8x512xf32, #tpu.memory_space<vmem>>, vector<1x8x512xf32>
    %16 = vector.shape_cast %15 : vector<1x8x512xf32> to vector<8x512xf32>
    %c0_17 = arith.constant 0 : index
    %c0_18 = arith.constant 0 : index
    %17 = vector.load %arg5[%c0_17, %c0_18] : memref<128x512xf32, #tpu.memory_space<vmem>>, vector<128x512xf32>
    %cst_19 = arith.constant dense<0.000000e+00> : vector<8x512xf32>
    %18 = tpu.matmul %12, %17, %cst_19 {dimension_numbers = #tpu.dot_dimension_numbers<[1], [0], [0], [1], [0, 0, 1, 1], [], []>} : vector<8x128xf32>, vector<128x512xf32>, vector<8x512xf32> -> vector<8x512xf32>
    %19 = arith.addf %16, %18 : vector<8x512xf32>
    %20 = vector.extract_strided_slice %19 {offsets = [0, 0], sizes = [8, 128], strides = [1, 1]} : vector<8x512xf32> to vector<8x128xf32>
    %cst_20 = arith.constant 5.000000e-01 : f32
    %21 = vector.broadcast %cst_20 : f32 to vector<8x128xf32>
    %22 = arith.mulf %21, %20 : vector<8x128xf32>
    %23 = math.tanh %22 : vector<8x128xf32>
    %cst_21 = arith.constant 5.000000e-01 : f32
    %24 = vector.broadcast %cst_21 : f32 to vector<8x128xf32>
    %25 = arith.mulf %24, %23 : vector<8x128xf32>
    %cst_22 = arith.constant 5.000000e-01 : f32
    %26 = vector.broadcast %cst_22 : f32 to vector<8x128xf32>
    %27 = arith.addf %25, %26 : vector<8x128xf32>
    %28 = vector.extract_strided_slice %19 {offsets = [0, 128], sizes = [8, 128], strides = [1, 1]} : vector<8x512xf32> to vector<8x128xf32>
    %cst_23 = arith.constant 5.000000e-01 : f32
    %29 = vector.broadcast %cst_23 : f32 to vector<8x128xf32>
    %30 = arith.mulf %29, %28 : vector<8x128xf32>
    %31 = math.tanh %30 : vector<8x128xf32>
    %cst_24 = arith.constant 5.000000e-01 : f32
    %32 = vector.broadcast %cst_24 : f32 to vector<8x128xf32>
    %33 = arith.mulf %32, %31 : vector<8x128xf32>
    %cst_25 = arith.constant 5.000000e-01 : f32
    %34 = vector.broadcast %cst_25 : f32 to vector<8x128xf32>
    %35 = arith.addf %33, %34 : vector<8x128xf32>
    %36 = vector.extract_strided_slice %19 {offsets = [0, 256], sizes = [8, 128], strides = [1, 1]} : vector<8x512xf32> to vector<8x128xf32>
    %37 = math.tanh %36 : vector<8x128xf32>
    %38 = vector.extract_strided_slice %19 {offsets = [0, 384], sizes = [8, 128], strides = [1, 1]} : vector<8x512xf32> to vector<8x128xf32>
    %cst_26 = arith.constant 5.000000e-01 : f32
    %39 = vector.broadcast %cst_26 : f32 to vector<8x128xf32>
    %40 = arith.mulf %39, %38 : vector<8x128xf32>
    %41 = math.tanh %40 : vector<8x128xf32>
    %cst_27 = arith.constant 5.000000e-01 : f32
    %42 = vector.broadcast %cst_27 : f32 to vector<8x128xf32>
    %43 = arith.mulf %42, %41 : vector<8x128xf32>
    %cst_28 = arith.constant 5.000000e-01 : f32
    %44 = vector.broadcast %cst_28 : f32 to vector<8x128xf32>
    %45 = arith.addf %43, %44 : vector<8x128xf32>
    %46 = arith.mulf %35, %13 : vector<8x128xf32>
    %47 = arith.mulf %27, %37 : vector<8x128xf32>
    %48 = arith.addf %46, %47 : vector<8x128xf32>
    %49 = math.tanh %48 : vector<8x128xf32>
    %50 = arith.mulf %45, %49 : vector<8x128xf32>
    %c1_i32 = arith.constant 1 : i32
    %51 = arith.index_cast %c1_i32 : i32 to index
    %c0_29 = arith.constant 0 : index
    %c0_30 = arith.constant 0 : index
    %52 = vector.load %arg11[%51, %c0_29, %c0_30] : memref<8x8x512xf32, #tpu.memory_space<vmem>>, vector<1x8x512xf32>
    %53 = vector.shape_cast %52 : vector<1x8x512xf32> to vector<8x512xf32>
    %c0_31 = arith.constant 0 : index
    %c0_32 = arith.constant 0 : index
    %54 = vector.load %arg5[%c0_31, %c0_32] : memref<128x512xf32, #tpu.memory_space<vmem>>, vector<128x512xf32>
    %cst_33 = arith.constant dense<0.000000e+00> : vector<8x512xf32>
    %55 = tpu.matmul %50, %54, %cst_33 {dimension_numbers = #tpu.dot_dimension_numbers<[1], [0], [0], [1], [0, 0, 1, 1], [], []>} : vector<8x128xf32>, vector<128x512xf32>, vector<8x512xf32> -> vector<8x512xf32>
    %56 = arith.addf %53, %55 : vector<8x512xf32>
    %57 = vector.extract_strided_slice %56 {offsets = [0, 0], sizes = [8, 128], strides = [1, 1]} : vector<8x512xf32> to vector<8x128xf32>
    %cst_34 = arith.constant 5.000000e-01 : f32
    %58 = vector.broadcast %cst_34 : f32 to vector<8x128xf32>
    %59 = arith.mulf %58, %57 : vector<8x128xf32>
    %60 = math.tanh %59 : vector<8x128xf32>
    %cst_35 = arith.constant 5.000000e-01 : f32
    %61 = vector.broadcast %cst_35 : f32 to vector<8x128xf32>
    %62 = arith.mulf %61, %60 : vector<8x128xf32>
    %cst_36 = arith.constant 5.000000e-01 : f32
    %63 = vector.broadcast %cst_36 : f32 to vector<8x128xf32>
    %64 = arith.addf %62, %63 : vector<8x128xf32>
    %65 = vector.extract_strided_slice %56 {offsets = [0, 128], sizes = [8, 128], strides = [1, 1]} : vector<8x512xf32> to vector<8x128xf32>
    %cst_37 = arith.constant 5.000000e-01 : f32
    %66 = vector.broadcast %cst_37 : f32 to vector<8x128xf32>
    %67 = arith.mulf %66, %65 : vector<8x128xf32>
    %68 = math.tanh %67 : vector<8x128xf32>
    %cst_38 = arith.constant 5.000000e-01 : f32
    %69 = vector.broadcast %cst_38 : f32 to vector<8x128xf32>
    %70 = arith.mulf %69, %68 : vector<8x128xf32>
    %cst_39 = arith.constant 5.000000e-01 : f32
    %71 = vector.broadcast %cst_39 : f32 to vector<8x128xf32>
    %72 = arith.addf %70, %71 : vector<8x128xf32>
    %73 = vector.extract_strided_slice %56 {offsets = [0, 256], sizes = [8, 128], strides = [1, 1]} : vector<8x512xf32> to vector<8x128xf32>
    %74 = math.tanh %73 : vector<8x128xf32>
    %75 = vector.extract_strided_slice %56 {offsets = [0, 384], sizes = [8, 128], strides = [1, 1]} : vector<8x512xf32> to vector<8x128xf32>
    %cst_40 = arith.constant 5.000000e-01 : f32
    %76 = vector.broadcast %cst_40 : f32 to vector<8x128xf32>
    %77 = arith.mulf %76, %75 : vector<8x128xf32>
    %78 = math.tanh %77 : vector<8x128xf32>
    %cst_41 = arith.constant 5.000000e-01 : f32
    %79 = vector.broadcast %cst_41 : f32 to vector<8x128xf32>
    %80 = arith.mulf %79, %78 : vector<8x128xf32>
    %cst_42 = arith.constant 5.000000e-01 : f32
    %81 = vector.broadcast %cst_42 : f32 to vector<8x128xf32>
    %82 = arith.addf %80, %81 : vector<8x128xf32>
    %83 = arith.mulf %72, %48 : vector<8x128xf32>
    %84 = arith.mulf %64, %74 : vector<8x128xf32>
    %85 = arith.addf %83, %84 : vector<8x128xf32>
    %86 = math.tanh %85 : vector<8x128xf32>
    %87 = arith.mulf %82, %86 : vector<8x128xf32>
    %c2_i32 = arith.constant 2 : i32
    %88 = arith.index_cast %c2_i32 : i32 to index
    %c0_43 = arith.constant 0 : index
    %c0_44 = arith.constant 0 : index
    %89 = vector.load %arg11[%88, %c0_43, %c0_44] : memref<8x8x512xf32, #tpu.memory_space<vmem>>, vector<1x8x512xf32>
    %90 = vector.shape_cast %89 : vector<1x8x512xf32> to vector<8x512xf32>
    %c0_45 = arith.constant 0 : index
    %c0_46 = arith.constant 0 : index
    %91 = vector.load %arg5[%c0_45, %c0_46] : memref<128x512xf32, #tpu.memory_space<vmem>>, vector<128x512xf32>
    %cst_47 = arith.constant dense<0.000000e+00> : vector<8x512xf32>
    %92 = tpu.matmul %87, %91, %cst_47 {dimension_numbers = #tpu.dot_dimension_numbers<[1], [0], [0], [1], [0, 0, 1, 1], [], []>} : vector<8x128xf32>, vector<128x512xf32>, vector<8x512xf32> -> vector<8x512xf32>
    %93 = arith.addf %90, %92 : vector<8x512xf32>
    %94 = vector.extract_strided_slice %93 {offsets = [0, 0], sizes = [8, 128], strides = [1, 1]} : vector<8x512xf32> to vector<8x128xf32>
    %cst_48 = arith.constant 5.000000e-01 : f32
    %95 = vector.broadcast %cst_48 : f32 to vector<8x128xf32>
    %96 = arith.mulf %95, %94 : vector<8x128xf32>
    %97 = math.tanh %96 : vector<8x128xf32>
    %cst_49 = arith.constant 5.000000e-01 : f32
    %98 = vector.broadcast %cst_49 : f32 to vector<8x128xf32>
    %99 = arith.mulf %98, %97 : vector<8x128xf32>
    %cst_50 = arith.constant 5.000000e-01 : f32
    %100 = vector.broadcast %cst_50 : f32 to vector<8x128xf32>
    %101 = arith.addf %99, %100 : vector<8x128xf32>
    %102 = vector.extract_strided_slice %93 {offsets = [0, 128], sizes = [8, 128], strides = [1, 1]} : vector<8x512xf32> to vector<8x128xf32>
    %cst_51 = arith.constant 5.000000e-01 : f32
    %103 = vector.broadcast %cst_51 : f32 to vector<8x128xf32>
    %104 = arith.mulf %103, %102 : vector<8x128xf32>
    %105 = math.tanh %104 : vector<8x128xf32>
    %cst_52 = arith.constant 5.000000e-01 : f32
    %106 = vector.broadcast %cst_52 : f32 to vector<8x128xf32>
    %107 = arith.mulf %106, %105 : vector<8x128xf32>
    %cst_53 = arith.constant 5.000000e-01 : f32
    %108 = vector.broadcast %cst_53 : f32 to vector<8x128xf32>
    %109 = arith.addf %107, %108 : vector<8x128xf32>
    %110 = vector.extract_strided_slice %93 {offsets = [0, 256], sizes = [8, 128], strides = [1, 1]} : vector<8x512xf32> to vector<8x128xf32>
    %111 = math.tanh %110 : vector<8x128xf32>
    %112 = vector.extract_strided_slice %93 {offsets = [0, 384], sizes = [8, 128], strides = [1, 1]} : vector<8x512xf32> to vector<8x128xf32>
    %cst_54 = arith.constant 5.000000e-01 : f32
    %113 = vector.broadcast %cst_54 : f32 to vector<8x128xf32>
    %114 = arith.mulf %113, %112 : vector<8x128xf32>
    %115 = math.tanh %114 : vector<8x128xf32>
    %cst_55 = arith.constant 5.000000e-01 : f32
    %116 = vector.broadcast %cst_55 : f32 to vector<8x128xf32>
    %117 = arith.mulf %116, %115 : vector<8x128xf32>
    %cst_56 = arith.constant 5.000000e-01 : f32
    %118 = vector.broadcast %cst_56 : f32 to vector<8x128xf32>
    %119 = arith.addf %117, %118 : vector<8x128xf32>
    %120 = arith.mulf %109, %85 : vector<8x128xf32>
    %121 = arith.mulf %101, %111 : vector<8x128xf32>
    %122 = arith.addf %120, %121 : vector<8x128xf32>
    %123 = math.tanh %122 : vector<8x128xf32>
    %124 = arith.mulf %119, %123 : vector<8x128xf32>
    %c3_i32 = arith.constant 3 : i32
    %125 = arith.index_cast %c3_i32 : i32 to index
    %c0_57 = arith.constant 0 : index
    %c0_58 = arith.constant 0 : index
    %126 = vector.load %arg11[%125, %c0_57, %c0_58] : memref<8x8x512xf32, #tpu.memory_space<vmem>>, vector<1x8x512xf32>
    %127 = vector.shape_cast %126 : vector<1x8x512xf32> to vector<8x512xf32>
    %c0_59 = arith.constant 0 : index
    %c0_60 = arith.constant 0 : index
    %128 = vector.load %arg5[%c0_59, %c0_60] : memref<128x512xf32, #tpu.memory_space<vmem>>, vector<128x512xf32>
    %cst_61 = arith.constant dense<0.000000e+00> : vector<8x512xf32>
    %129 = tpu.matmul %124, %128, %cst_61 {dimension_numbers = #tpu.dot_dimension_numbers<[1], [0], [0], [1], [0, 0, 1, 1], [], []>} : vector<8x128xf32>, vector<128x512xf32>, vector<8x512xf32> -> vector<8x512xf32>
    %130 = arith.addf %127, %129 : vector<8x512xf32>
    %131 = vector.extract_strided_slice %130 {offsets = [0, 0], sizes = [8, 128], strides = [1, 1]} : vector<8x512xf32> to vector<8x128xf32>
    %cst_62 = arith.constant 5.000000e-01 : f32
    %132 = vector.broadcast %cst_62 : f32 to vector<8x128xf32>
    %133 = arith.mulf %132, %131 : vector<8x128xf32>
    %134 = math.tanh %133 : vector<8x128xf32>
    %cst_63 = arith.constant 5.000000e-01 : f32
    %135 = vector.broadcast %cst_63 : f32 to vector<8x128xf32>
    %136 = arith.mulf %135, %134 : vector<8x128xf32>
    %cst_64 = arith.constant 5.000000e-01 : f32
    %137 = vector.broadcast %cst_64 : f32 to vector<8x128xf32>
    %138 = arith.addf %136, %137 : vector<8x128xf32>
    %139 = vector.extract_strided_slice %130 {offsets = [0, 128], sizes = [8, 128], strides = [1, 1]} : vector<8x512xf32> to vector<8x128xf32>
    %cst_65 = arith.constant 5.000000e-01 : f32
    %140 = vector.broadcast %cst_65 : f32 to vector<8x128xf32>
    %141 = arith.mulf %140, %139 : vector<8x128xf32>
    %142 = math.tanh %141 : vector<8x128xf32>
    %cst_66 = arith.constant 5.000000e-01 : f32
    %143 = vector.broadcast %cst_66 : f32 to vector<8x128xf32>
    %144 = arith.mulf %143, %142 : vector<8x128xf32>
    %cst_67 = arith.constant 5.000000e-01 : f32
    %145 = vector.broadcast %cst_67 : f32 to vector<8x128xf32>
    %146 = arith.addf %144, %145 : vector<8x128xf32>
    %147 = vector.extract_strided_slice %130 {offsets = [0, 256], sizes = [8, 128], strides = [1, 1]} : vector<8x512xf32> to vector<8x128xf32>
    %148 = math.tanh %147 : vector<8x128xf32>
    %149 = vector.extract_strided_slice %130 {offsets = [0, 384], sizes = [8, 128], strides = [1, 1]} : vector<8x512xf32> to vector<8x128xf32>
    %cst_68 = arith.constant 5.000000e-01 : f32
    %150 = vector.broadcast %cst_68 : f32 to vector<8x128xf32>
    %151 = arith.mulf %150, %149 : vector<8x128xf32>
    %152 = math.tanh %151 : vector<8x128xf32>
    %cst_69 = arith.constant 5.000000e-01 : f32
    %153 = vector.broadcast %cst_69 : f32 to vector<8x128xf32>
    %154 = arith.mulf %153, %152 : vector<8x128xf32>
    %cst_70 = arith.constant 5.000000e-01 : f32
    %155 = vector.broadcast %cst_70 : f32 to vector<8x128xf32>
    %156 = arith.addf %154, %155 : vector<8x128xf32>
    %157 = arith.mulf %146, %122 : vector<8x128xf32>
    %158 = arith.mulf %138, %148 : vector<8x128xf32>
    %159 = arith.addf %157, %158 : vector<8x128xf32>
    %160 = math.tanh %159 : vector<8x128xf32>
    %161 = arith.mulf %156, %160 : vector<8x128xf32>
    %c4_i32 = arith.constant 4 : i32
    %162 = arith.index_cast %c4_i32 : i32 to index
    %c0_71 = arith.constant 0 : index
    %c0_72 = arith.constant 0 : index
    %163 = vector.load %arg11[%162, %c0_71, %c0_72] : memref<8x8x512xf32, #tpu.memory_space<vmem>>, vector<1x8x512xf32>
    %164 = vector.shape_cast %163 : vector<1x8x512xf32> to vector<8x512xf32>
    %c0_73 = arith.constant 0 : index
    %c0_74 = arith.constant 0 : index
    %165 = vector.load %arg5[%c0_73, %c0_74] : memref<128x512xf32, #tpu.memory_space<vmem>>, vector<128x512xf32>
    %cst_75 = arith.constant dense<0.000000e+00> : vector<8x512xf32>
    %166 = tpu.matmul %161, %165, %cst_75 {dimension_numbers = #tpu.dot_dimension_numbers<[1], [0], [0], [1], [0, 0, 1, 1], [], []>} : vector<8x128xf32>, vector<128x512xf32>, vector<8x512xf32> -> vector<8x512xf32>
    %167 = arith.addf %164, %166 : vector<8x512xf32>
    %168 = vector.extract_strided_slice %167 {offsets = [0, 0], sizes = [8, 128], strides = [1, 1]} : vector<8x512xf32> to vector<8x128xf32>
    %cst_76 = arith.constant 5.000000e-01 : f32
    %169 = vector.broadcast %cst_76 : f32 to vector<8x128xf32>
    %170 = arith.mulf %169, %168 : vector<8x128xf32>
    %171 = math.tanh %170 : vector<8x128xf32>
    %cst_77 = arith.constant 5.000000e-01 : f32
    %172 = vector.broadcast %cst_77 : f32 to vector<8x128xf32>
    %173 = arith.mulf %172, %171 : vector<8x128xf32>
    %cst_78 = arith.constant 5.000000e-01 : f32
    %174 = vector.broadcast %cst_78 : f32 to vector<8x128xf32>
    %175 = arith.addf %173, %174 : vector<8x128xf32>
    %176 = vector.extract_strided_slice %167 {offsets = [0, 128], sizes = [8, 128], strides = [1, 1]} : vector<8x512xf32> to vector<8x128xf32>
    %cst_79 = arith.constant 5.000000e-01 : f32
    %177 = vector.broadcast %cst_79 : f32 to vector<8x128xf32>
    %178 = arith.mulf %177, %176 : vector<8x128xf32>
    %179 = math.tanh %178 : vector<8x128xf32>
    %cst_80 = arith.constant 5.000000e-01 : f32
    %180 = vector.broadcast %cst_80 : f32 to vector<8x128xf32>
    %181 = arith.mulf %180, %179 : vector<8x128xf32>
    %cst_81 = arith.constant 5.000000e-01 : f32
    %182 = vector.broadcast %cst_81 : f32 to vector<8x128xf32>
    %183 = arith.addf %181, %182 : vector<8x128xf32>
    %184 = vector.extract_strided_slice %167 {offsets = [0, 256], sizes = [8, 128], strides = [1, 1]} : vector<8x512xf32> to vector<8x128xf32>
    %185 = math.tanh %184 : vector<8x128xf32>
    %186 = vector.extract_strided_slice %167 {offsets = [0, 384], sizes = [8, 128], strides = [1, 1]} : vector<8x512xf32> to vector<8x128xf32>
    %cst_82 = arith.constant 5.000000e-01 : f32
    %187 = vector.broadcast %cst_82 : f32 to vector<8x128xf32>
    %188 = arith.mulf %187, %186 : vector<8x128xf32>
    %189 = math.tanh %188 : vector<8x128xf32>
    %cst_83 = arith.constant 5.000000e-01 : f32
    %190 = vector.broadcast %cst_83 : f32 to vector<8x128xf32>
    %191 = arith.mulf %190, %189 : vector<8x128xf32>
    %cst_84 = arith.constant 5.000000e-01 : f32
    %192 = vector.broadcast %cst_84 : f32 to vector<8x128xf32>
    %193 = arith.addf %191, %192 : vector<8x128xf32>
    %194 = arith.mulf %183, %159 : vector<8x128xf32>
    %195 = arith.mulf %175, %185 : vector<8x128xf32>
    %196 = arith.addf %194, %195 : vector<8x128xf32>
    %197 = math.tanh %196 : vector<8x128xf32>
    %198 = arith.mulf %193, %197 : vector<8x128xf32>
    %c5_i32 = arith.constant 5 : i32
    %199 = arith.index_cast %c5_i32 : i32 to index
    %c0_85 = arith.constant 0 : index
    %c0_86 = arith.constant 0 : index
    %200 = vector.load %arg11[%199, %c0_85, %c0_86] : memref<8x8x512xf32, #tpu.memory_space<vmem>>, vector<1x8x512xf32>
    %201 = vector.shape_cast %200 : vector<1x8x512xf32> to vector<8x512xf32>
    %c0_87 = arith.constant 0 : index
    %c0_88 = arith.constant 0 : index
    %202 = vector.load %arg5[%c0_87, %c0_88] : memref<128x512xf32, #tpu.memory_space<vmem>>, vector<128x512xf32>
    %cst_89 = arith.constant dense<0.000000e+00> : vector<8x512xf32>
    %203 = tpu.matmul %198, %202, %cst_89 {dimension_numbers = #tpu.dot_dimension_numbers<[1], [0], [0], [1], [0, 0, 1, 1], [], []>} : vector<8x128xf32>, vector<128x512xf32>, vector<8x512xf32> -> vector<8x512xf32>
    %204 = arith.addf %201, %203 : vector<8x512xf32>
    %205 = vector.extract_strided_slice %204 {offsets = [0, 0], sizes = [8, 128], strides = [1, 1]} : vector<8x512xf32> to vector<8x128xf32>
    %cst_90 = arith.constant 5.000000e-01 : f32
    %206 = vector.broadcast %cst_90 : f32 to vector<8x128xf32>
    %207 = arith.mulf %206, %205 : vector<8x128xf32>
    %208 = math.tanh %207 : vector<8x128xf32>
    %cst_91 = arith.constant 5.000000e-01 : f32
    %209 = vector.broadcast %cst_91 : f32 to vector<8x128xf32>
    %210 = arith.mulf %209, %208 : vector<8x128xf32>
    %cst_92 = arith.constant 5.000000e-01 : f32
    %211 = vector.broadcast %cst_92 : f32 to vector<8x128xf32>
    %212 = arith.addf %210, %211 : vector<8x128xf32>
    %213 = vector.extract_strided_slice %204 {offsets = [0, 128], sizes = [8, 128], strides = [1, 1]} : vector<8x512xf32> to vector<8x128xf32>
    %cst_93 = arith.constant 5.000000e-01 : f32
    %214 = vector.broadcast %cst_93 : f32 to vector<8x128xf32>
    %215 = arith.mulf %214, %213 : vector<8x128xf32>
    %216 = math.tanh %215 : vector<8x128xf32>
    %cst_94 = arith.constant 5.000000e-01 : f32
    %217 = vector.broadcast %cst_94 : f32 to vector<8x128xf32>
    %218 = arith.mulf %217, %216 : vector<8x128xf32>
    %cst_95 = arith.constant 5.000000e-01 : f32
    %219 = vector.broadcast %cst_95 : f32 to vector<8x128xf32>
    %220 = arith.addf %218, %219 : vector<8x128xf32>
    %221 = vector.extract_strided_slice %204 {offsets = [0, 256], sizes = [8, 128], strides = [1, 1]} : vector<8x512xf32> to vector<8x128xf32>
    %222 = math.tanh %221 : vector<8x128xf32>
    %223 = vector.extract_strided_slice %204 {offsets = [0, 384], sizes = [8, 128], strides = [1, 1]} : vector<8x512xf32> to vector<8x128xf32>
    %cst_96 = arith.constant 5.000000e-01 : f32
    %224 = vector.broadcast %cst_96 : f32 to vector<8x128xf32>
    %225 = arith.mulf %224, %223 : vector<8x128xf32>
    %226 = math.tanh %225 : vector<8x128xf32>
    %cst_97 = arith.constant 5.000000e-01 : f32
    %227 = vector.broadcast %cst_97 : f32 to vector<8x128xf32>
    %228 = arith.mulf %227, %226 : vector<8x128xf32>
    %cst_98 = arith.constant 5.000000e-01 : f32
    %229 = vector.broadcast %cst_98 : f32 to vector<8x128xf32>
    %230 = arith.addf %228, %229 : vector<8x128xf32>
    %231 = arith.mulf %220, %196 : vector<8x128xf32>
    %232 = arith.mulf %212, %222 : vector<8x128xf32>
    %233 = arith.addf %231, %232 : vector<8x128xf32>
    %234 = math.tanh %233 : vector<8x128xf32>
    %235 = arith.mulf %230, %234 : vector<8x128xf32>
    %c6_i32 = arith.constant 6 : i32
    %236 = arith.index_cast %c6_i32 : i32 to index
    %c0_99 = arith.constant 0 : index
    %c0_100 = arith.constant 0 : index
    %237 = vector.load %arg11[%236, %c0_99, %c0_100] : memref<8x8x512xf32, #tpu.memory_space<vmem>>, vector<1x8x512xf32>
    %238 = vector.shape_cast %237 : vector<1x8x512xf32> to vector<8x512xf32>
    %c0_101 = arith.constant 0 : index
    %c0_102 = arith.constant 0 : index
    %239 = vector.load %arg5[%c0_101, %c0_102] : memref<128x512xf32, #tpu.memory_space<vmem>>, vector<128x512xf32>
    %cst_103 = arith.constant dense<0.000000e+00> : vector<8x512xf32>
    %240 = tpu.matmul %235, %239, %cst_103 {dimension_numbers = #tpu.dot_dimension_numbers<[1], [0], [0], [1], [0, 0, 1, 1], [], []>} : vector<8x128xf32>, vector<128x512xf32>, vector<8x512xf32> -> vector<8x512xf32>
    %241 = arith.addf %238, %240 : vector<8x512xf32>
    %242 = vector.extract_strided_slice %241 {offsets = [0, 0], sizes = [8, 128], strides = [1, 1]} : vector<8x512xf32> to vector<8x128xf32>
    %cst_104 = arith.constant 5.000000e-01 : f32
    %243 = vector.broadcast %cst_104 : f32 to vector<8x128xf32>
    %244 = arith.mulf %243, %242 : vector<8x128xf32>
    %245 = math.tanh %244 : vector<8x128xf32>
    %cst_105 = arith.constant 5.000000e-01 : f32
    %246 = vector.broadcast %cst_105 : f32 to vector<8x128xf32>
    %247 = arith.mulf %246, %245 : vector<8x128xf32>
    %cst_106 = arith.constant 5.000000e-01 : f32
    %248 = vector.broadcast %cst_106 : f32 to vector<8x128xf32>
    %249 = arith.addf %247, %248 : vector<8x128xf32>
    %250 = vector.extract_strided_slice %241 {offsets = [0, 128], sizes = [8, 128], strides = [1, 1]} : vector<8x512xf32> to vector<8x128xf32>
    %cst_107 = arith.constant 5.000000e-01 : f32
    %251 = vector.broadcast %cst_107 : f32 to vector<8x128xf32>
    %252 = arith.mulf %251, %250 : vector<8x128xf32>
    %253 = math.tanh %252 : vector<8x128xf32>
    %cst_108 = arith.constant 5.000000e-01 : f32
    %254 = vector.broadcast %cst_108 : f32 to vector<8x128xf32>
    %255 = arith.mulf %254, %253 : vector<8x128xf32>
    %cst_109 = arith.constant 5.000000e-01 : f32
    %256 = vector.broadcast %cst_109 : f32 to vector<8x128xf32>
    %257 = arith.addf %255, %256 : vector<8x128xf32>
    %258 = vector.extract_strided_slice %241 {offsets = [0, 256], sizes = [8, 128], strides = [1, 1]} : vector<8x512xf32> to vector<8x128xf32>
    %259 = math.tanh %258 : vector<8x128xf32>
    %260 = vector.extract_strided_slice %241 {offsets = [0, 384], sizes = [8, 128], strides = [1, 1]} : vector<8x512xf32> to vector<8x128xf32>
    %cst_110 = arith.constant 5.000000e-01 : f32
    %261 = vector.broadcast %cst_110 : f32 to vector<8x128xf32>
    %262 = arith.mulf %261, %260 : vector<8x128xf32>
    %263 = math.tanh %262 : vector<8x128xf32>
    %cst_111 = arith.constant 5.000000e-01 : f32
    %264 = vector.broadcast %cst_111 : f32 to vector<8x128xf32>
    %265 = arith.mulf %264, %263 : vector<8x128xf32>
    %cst_112 = arith.constant 5.000000e-01 : f32
    %266 = vector.broadcast %cst_112 : f32 to vector<8x128xf32>
    %267 = arith.addf %265, %266 : vector<8x128xf32>
    %268 = arith.mulf %257, %233 : vector<8x128xf32>
    %269 = arith.mulf %249, %259 : vector<8x128xf32>
    %270 = arith.addf %268, %269 : vector<8x128xf32>
    %271 = math.tanh %270 : vector<8x128xf32>
    %272 = arith.mulf %267, %271 : vector<8x128xf32>
    %c7_i32 = arith.constant 7 : i32
    %273 = arith.index_cast %c7_i32 : i32 to index
    %c0_113 = arith.constant 0 : index
    %c0_114 = arith.constant 0 : index
    %274 = vector.load %arg11[%273, %c0_113, %c0_114] : memref<8x8x512xf32, #tpu.memory_space<vmem>>, vector<1x8x512xf32>
    %275 = vector.shape_cast %274 : vector<1x8x512xf32> to vector<8x512xf32>
    %c0_115 = arith.constant 0 : index
    %c0_116 = arith.constant 0 : index
    %276 = vector.load %arg5[%c0_115, %c0_116] : memref<128x512xf32, #tpu.memory_space<vmem>>, vector<128x512xf32>
    %cst_117 = arith.constant dense<0.000000e+00> : vector<8x512xf32>
    %277 = tpu.matmul %272, %276, %cst_117 {dimension_numbers = #tpu.dot_dimension_numbers<[1], [0], [0], [1], [0, 0, 1, 1], [], []>} : vector<8x128xf32>, vector<128x512xf32>, vector<8x512xf32> -> vector<8x512xf32>
    %278 = arith.addf %275, %277 : vector<8x512xf32>
    %279 = vector.extract_strided_slice %278 {offsets = [0, 0], sizes = [8, 128], strides = [1, 1]} : vector<8x512xf32> to vector<8x128xf32>
    %cst_118 = arith.constant 5.000000e-01 : f32
    %280 = vector.broadcast %cst_118 : f32 to vector<8x128xf32>
    %281 = arith.mulf %280, %279 : vector<8x128xf32>
    %282 = math.tanh %281 : vector<8x128xf32>
    %cst_119 = arith.constant 5.000000e-01 : f32
    %283 = vector.broadcast %cst_119 : f32 to vector<8x128xf32>
    %284 = arith.mulf %283, %282 : vector<8x128xf32>
    %cst_120 = arith.constant 5.000000e-01 : f32
    %285 = vector.broadcast %cst_120 : f32 to vector<8x128xf32>
    %286 = arith.addf %284, %285 : vector<8x128xf32>
    %287 = vector.extract_strided_slice %278 {offsets = [0, 128], sizes = [8, 128], strides = [1, 1]} : vector<8x512xf32> to vector<8x128xf32>
    %cst_121 = arith.constant 5.000000e-01 : f32
    %288 = vector.broadcast %cst_121 : f32 to vector<8x128xf32>
    %289 = arith.mulf %288, %287 : vector<8x128xf32>
    %290 = math.tanh %289 : vector<8x128xf32>
    %cst_122 = arith.constant 5.000000e-01 : f32
    %291 = vector.broadcast %cst_122 : f32 to vector<8x128xf32>
    %292 = arith.mulf %291, %290 : vector<8x128xf32>
    %cst_123 = arith.constant 5.000000e-01 : f32
    %293 = vector.broadcast %cst_123 : f32 to vector<8x128xf32>
    %294 = arith.addf %292, %293 : vector<8x128xf32>
    %295 = vector.extract_strided_slice %278 {offsets = [0, 256], sizes = [8, 128], strides = [1, 1]} : vector<8x512xf32> to vector<8x128xf32>
    %296 = math.tanh %295 : vector<8x128xf32>
    %297 = vector.extract_strided_slice %278 {offsets = [0, 384], sizes = [8, 128], strides = [1, 1]} : vector<8x512xf32> to vector<8x128xf32>
    %cst_124 = arith.constant 5.000000e-01 : f32
    %298 = vector.broadcast %cst_124 : f32 to vector<8x128xf32>
    %299 = arith.mulf %298, %297 : vector<8x128xf32>
    %300 = math.tanh %299 : vector<8x128xf32>
    %cst_125 = arith.constant 5.000000e-01 : f32
    %301 = vector.broadcast %cst_125 : f32 to vector<8x128xf32>
    %302 = arith.mulf %301, %300 : vector<8x128xf32>
    %cst_126 = arith.constant 5.000000e-01 : f32
    %303 = vector.broadcast %cst_126 : f32 to vector<8x128xf32>
    %304 = arith.addf %302, %303 : vector<8x128xf32>
    %305 = arith.mulf %294, %270 : vector<8x128xf32>
    %306 = arith.mulf %286, %296 : vector<8x128xf32>
    %307 = arith.addf %305, %306 : vector<8x128xf32>
    %308 = math.tanh %307 : vector<8x128xf32>
    %309 = arith.mulf %304, %308 : vector<8x128xf32>
    %c8_i32 = arith.constant 8 : i32
    %c0_127 = arith.constant 0 : index
    %c0_128 = arith.constant 0 : index
    %310 = vector.load %arg9[%c0_127, %c0_128] : memref<8x128xf32, #tpu.memory_space<vmem>>, vector<8x128xf32>
    tpu.vector_store %arg9[%c0_127, %c0_128], %309 {strides = array<i32>} : memref<8x128xf32, #tpu.memory_space<vmem>>, vector<8x128xf32>,
    %c0_129 = arith.constant 0 : index
    %c0_130 = arith.constant 0 : index
    %311 = vector.load %arg10[%c0_129, %c0_130] : memref<8x128xf32, #tpu.memory_space<vmem>>, vector<8x128xf32>
    tpu.vector_store %arg10[%c0_129, %c0_130], %307 {strides = array<i32>} : memref<8x128xf32, #tpu.memory_space<vmem>>, vector<8x128xf32>,
    %c0_i32_131 = arith.constant 0 : i32
    %312 = arith.cmpi eq, %arg1, %c0_i32_131 : i32
    %313 = arith.extui %312 : i1 to i32
    %c0_i32_132 = arith.constant 0 : i32
    %314 = arith.cmpi ne, %313, %c0_i32_132 : i32
    scf.if %314 {
      %c0_133 = arith.constant 0 : index
      %c0_134 = arith.constant 0 : index
      %315 = vector.load %arg6[%c0_133, %c0_134] : memref<128x128xf32, #tpu.memory_space<vmem>>, vector<128x128xf32>
      %cst_135 = arith.constant dense<0.000000e+00> : vector<8x128xf32>
      %316 = tpu.matmul %309, %315, %cst_135 {dimension_numbers = #tpu.dot_dimension_numbers<[1], [0], [0], [1], [0, 0, 1, 1], [], []>} : vector<8x128xf32>, vector<128x128xf32>, vector<8x128xf32> -> vector<8x128xf32>
      %c0_136 = arith.constant 0 : index
      %c0_137 = arith.constant 0 : index
      %317 = vector.load %arg7[%c0_136, %c0_137] : memref<1x128xf32, #tpu.memory_space<vmem>>, vector<1x128xf32>
      %318 = vector.broadcast %317 : vector<1x128xf32> to vector<8x128xf32>
      %319 = arith.addf %316, %318 : vector<8x128xf32>
      %c0_138 = arith.constant 0 : index
      %c0_139 = arith.constant 0 : index
      %320 = vector.load %arg8[%c0_138, %c0_139] : memref<8x128xf32, #tpu.memory_space<vmem>>, vector<8x128xf32>
      tpu.vector_store %arg8[%c0_138, %c0_139], %319 {strides = array<i32>} : memref<8x128xf32, #tpu.memory_space<vmem>>, vector<8x128xf32>,
    } else {
    }
    return
  }
  func.func @transform_0(%arg0: i32, %arg1: i32) -> (i32, i32, i32) {
    %c0_i32 = arith.constant 0 : i32
    %c0_i32_0 = arith.constant 0 : i32
    return %arg1, %arg0, %c0_i32 : i32, i32, i32
  }
  func.func @transform_1(%arg0: i32, %arg1: i32) -> (i32, i32) {
    %c0_i32 = arith.constant 0 : i32
    %c0_i32_0 = arith.constant 0 : i32
    %c0_i32_1 = arith.constant 0 : i32
    return %c0_i32, %c0_i32_0 : i32, i32
  }
  func.func @transform_2(%arg0: i32, %arg1: i32) -> (i32, i32) {
    %c0_i32 = arith.constant 0 : i32
    %c0_i32_0 = arith.constant 0 : i32
    %c0_i32_1 = arith.constant 0 : i32
    return %c0_i32, %c0_i32_0 : i32, i32
  }
  func.func @transform_3(%arg0: i32, %arg1: i32) -> (i32, i32) {
    %c0_i32 = arith.constant 0 : i32
    %c0_i32_0 = arith.constant 0 : i32
    %c0_i32_1 = arith.constant 0 : i32
    return %c0_i32, %c0_i32_0 : i32, i32
  }
  func.func @transform_4(%arg0: i32, %arg1: i32) -> (i32, i32) {
    %c0_i32 = arith.constant 0 : i32
    %c0_i32_0 = arith.constant 0 : i32
    %c0_i32_1 = arith.constant 0 : i32
    return %c0_i32, %c0_i32_0 : i32, i32
  }
  func.func @transform_5(%arg0: i32, %arg1: i32) -> (i32, i32) {
    %c0_i32 = arith.constant 0 : i32
    %c0_i32_0 = arith.constant 0 : i32
    %c0_i32_1 = arith.constant 0 : i32
    return %c0_i32, %c0_i32_0 : i32, i32
  }
  func.func @transform_6(%arg0: i32, %arg1: i32) -> (i32, i32) {
    %c0_i32 = arith.constant 0 : i32
    %c0_i32_0 = arith.constant 0 : i32
    return %arg0, %c0_i32 : i32, i32
  }
}

</mosaic_0001>

<llo_original>
// kernel: tpu_custom_call.1
$region0: #{tpu_custom_call.1}
  #allocation0 [shape = 'u32[]', space=smem, size = 0x4, offset = 0x4, fixed_abs, tag = 'smem constant byte address 0x4 - core index']
  #allocation1 [shape = 'u32[72,128]{1,0:T(1,128)}', space=vmem, size = 0x9000, scoped, tag = 'internal scratch']
  #allocation2 [shape = 'f32[8,128]{1,0:T(8,128)}', space=vmem, size = 0x1000, scoped, tag = 'scratch operand']
  #allocation3 [shape = 'f32[8,128]{1,0:T(8,128)}', space=vmem, size = 0x1000, scoped, tag = 'scratch operand']
  #allocation4 [shape = 'f32[8,8,512]{2,1,0:T(8,128)}', space=vmem, size = 0x20000, scoped, tag = 'scratch operand']
  %s0 = inlined_call_operand.hbm [shape: f32[8,8,16], index: 0, kind: input, shape index: {}]
  %s1 = inlined_call_operand.hbm [shape: f32[16,512], index: 1, kind: input, shape index: {}]
  %s2 = inlined_call_operand.hbm [shape: f32[1,512], index: 2, kind: input, shape index: {}]
  %s3 = inlined_call_operand.hbm [shape: f32[128,512], index: 3, kind: input, shape index: {}]
  %s4 = inlined_call_operand.hbm [shape: f32[128,128], index: 4, kind: input, shape index: {}]
  %s5 = inlined_call_operand.vmem [shape: f32[1,128], index: 5, kind: input, shape index: {}]
  %s6 = inlined_call_operand.hbm [shape: f32[8,128], index: 6, kind: output, shape index: {}]
  %s7 = sld [smem:[#allocation0]]
  $region62: #{tpu_custom_call.1} parent=0
    _
  %s9 = ssub.s32 1, %s7
  %s10 = scalar_select 0, %s9, %s7
  $region1: #{tpu_custom_call.1} parent=0
    #allocation5 [shape = 'u8[32768]{0}', space=vmem, size = 0x8000, scoped, tag = 'input window, operand 0, single buffered']
    #allocation6 [shape = 's32[1]{0}', space=sflag, size = 0x4, scoped, tag = 'scoped memory for tpu_custom_call.1']
    #allocation7 [shape = 's32[1]{0}', space=sflag, size = 0x4, scoped, tag = 'scoped memory for tpu_custom_call.1']
    #allocation8 [shape = 'u8[32768]{0}', space=vmem, size = 0x8000, scoped, tag = 'input window, operand 1, single buffered']
    #allocation9 [shape = 's32[1]{0}', space=sflag, size = 0x4, scoped, tag = 'scoped memory for tpu_custom_call.1']
    #allocation10 [shape = 'u8[2048]{0}', space=vmem, size = 0x800, scoped, tag = 'input window, operand 2, single buffered']
    #allocation11 [shape = 'u8[262144]{0}', space=vmem, size = 0x40000, scoped, tag = 'input window, operand 3, single buffered']
    #allocation12 [shape = 's32[1]{0}', space=sflag, size = 0x4, scoped, tag = 'scoped memory for tpu_custom_call.1']
    #allocation13 [shape = 'u8[65536]{0}', space=vmem, size = 0x10000, scoped, tag = 'input window, operand 4, single buffered']
    #allocation14 [shape = 'u8[4096]{0}', space=vmem, size = 0x1000, scoped, tag = 'output window, operand 0, single buffered']
    %11 = vsyncpa [#allocation6], 0
    %12 = vsyncpa [#allocation9], 0
    %13 = vsyncpa [#allocation12], 0
    %14 = vsyncpa [#allocation7], 0
    // Predicated region
    $region2: #{tpu_custom_call.1} parent=1 // pred_check
      _
    $region3: #{tpu_custom_call.1} parent=1 // pred_check_branch
      %16 = sbr.rel (0) target = $region5
    $region4: #{tpu_custom_call.1} parent=1 // pred_region
      %18 = vsyncadd [#allocation6], 0
      %s19 = sshll.u32 %s0, 4
      %s20 = int_to_ptr.hbm [resolvable:$true] %s19
      %s21 = sshll.u32 [#allocation5], 4
      %s22 = int_to_ptr.vmem [resolvable:$true] %s21
      %27 = dma.hbm_to_vmem [thread:$0]  %s20, 1024, %s22, [#allocation6], 128, 128, 8
    $region5: #{tpu_custom_call.1} parent=1 // pred_fallthru
      _
    // Predicated region
    $region6: #{tpu_custom_call.1} parent=1 // pred_check
      _
    $region7: #{tpu_custom_call.1} parent=1 // pred_check_branch
      %29 = sbr.rel (0) target = $region9
    $region8: #{tpu_custom_call.1} parent=1 // pred_region
      %31 = vsyncadd [#allocation9], 0
      %s32 = sshll.u32 %s1, 4
      %s33 = int_to_ptr.hbm [resolvable:$true] %s32
      %s34 = sshll.u32 [#allocation8], 4
      %s35 = int_to_ptr.vmem [resolvable:$true] %s34
      %40 = dma.hbm_to_vmem [thread:$0]  %s33, 1024, %s35, [#allocation9], 512, 512, 32
    $region9: #{tpu_custom_call.1} parent=1 // pred_fallthru
      _
    // Predicated region
    $region10: #{tpu_custom_call.1} parent=1 // pred_check
      _
    $region11: #{tpu_custom_call.1} parent=1 // pred_check_branch
      %42 = sbr.rel (0) target = $region13
    $region12: #{tpu_custom_call.1} parent=1 // pred_region
      %44 = vsyncadd [#allocation9], 0
      %s46 = sshll.u32 %s2, 4
      %s47 = int_to_ptr.hbm [resolvable:$true] %s46
      %s48 = sshll.u32 [#allocation10], 4
      %s49 = int_to_ptr.vmem [resolvable:$true] %s48
      %51 = dma.hbm_to_vmem [thread:$0]  %s47, 64, %s49, [#allocation9]
    $region13: #{tpu_custom_call.1} parent=1 // pred_fallthru
      _
    // Predicated region
    $region14: #{tpu_custom_call.1} parent=1 // pred_check
      _
    $region15: #{tpu_custom_call.1} parent=1 // pred_check_branch
      %53 = sbr.rel (0) target = $region17
    $region16: #{tpu_custom_call.1} parent=1 // pred_region
      %55 = vsyncadd [#allocation12], 0
      %s56 = sshll.u32 %s3, 4
      %s57 = int_to_ptr.hbm [resolvable:$true] %s56
      %s58 = sshll.u32 [#allocation11], 4
      %s59 = int_to_ptr.vmem [resolvable:$true] %s58
      %64 = dma.hbm_to_vmem [thread:$0]  %s57, 8192, %s59, [#allocation12], 512, 512, 32
    $region17: #{tpu_custom_call.1} parent=1 // pred_fallthru
      _
    // Predicated region
    $region18: #{tpu_custom_call.1} parent=1 // pred_check
      _
    $region19: #{tpu_custom_call.1} parent=1 // pred_check_branch
      %66 = sbr.rel (0) target = $region21
    $region20: #{tpu_custom_call.1} parent=1 // pred_region
      %68 = vsyncadd [#allocation12], 0
      %s69 = sshll.u32 %s4, 4
      %s70 = int_to_ptr.hbm [resolvable:$true] %s69
      %s71 = sshll.u32 [#allocation13], 4
      %s72 = int_to_ptr.vmem [resolvable:$true] %s71
      %77 = dma.hbm_to_vmem [thread:$0]  %s70, 2048, %s72, [#allocation12], 128, 128, 8
    $region21: #{tpu_custom_call.1} parent=1 // pred_fallthru
      _
    // Predicated region
    $region22: #{tpu_custom_call.1} parent=1 // pred_check
      _
    $region23: #{tpu_custom_call.1} parent=1 // pred_check_branch
      %79 = sbr.rel (0) target = $region25
    $region24: #{tpu_custom_call.1} parent=1 // pred_region
      _
    $region25: #{tpu_custom_call.1} parent=1 // pred_fallthru
      _
    // Predicated region
    $region26: #{tpu_custom_call.1} parent=1 // pred_check
      _
    $region27: #{tpu_custom_call.1} parent=1 // pred_check_branch
      %81 = sbr.rel (0) target = $region29
    $region28: #{tpu_custom_call.1} parent=1 // pred_region
      %83 = dma.done [#allocation6], 1024
    $region29: #{tpu_custom_call.1} parent=1 // pred_fallthru
      _
    // Predicated region
    $region30: #{tpu_custom_call.1} parent=1 // pred_check
      _
    $region31: #{tpu_custom_call.1} parent=1 // pred_check_branch
      %85 = sbr.rel (0) target = $region33
    $region32: #{tpu_custom_call.1} parent=1 // pred_region
      %87 = dma.done [#allocation9], 1024
    $region33: #{tpu_custom_call.1} parent=1 // pred_fallthru
      _
    // Predicated region
    $region34: #{tpu_custom_call.1} parent=1 // pred_check
      _
    $region35: #{tpu_custom_call.1} parent=1 // pred_check_branch
      %89 = sbr.rel (0) target = $region37
    $region36: #{tpu_custom_call.1} parent=1 // pred_region
      %91 = dma.done [#allocation9], 64
    $region37: #{tpu_custom_call.1} parent=1 // pred_fallthru
      _
    // Predicated region
    $region38: #{tpu_custom_call.1} parent=1 // pred_check
      _
    $region39: #{tpu_custom_call.1} parent=1 // pred_check_branch
      %93 = sbr.rel (0) target = $region41
    $region40: #{tpu_custom_call.1} parent=1 // pred_region
      %95 = dma.done [#allocation12], 8192
    $region41: #{tpu_custom_call.1} parent=1 // pred_fallthru
      _
    // Predicated region
    $region42: #{tpu_custom_call.1} parent=1 // pred_check
      _
    $region43: #{tpu_custom_call.1} parent=1 // pred_check_branch
      %97 = sbr.rel (0) target = $region45
    $region44: #{tpu_custom_call.1} parent=1 // pred_region
      %99 = dma.done [#allocation12], 2048
    $region45: #{tpu_custom_call.1} parent=1 // pred_fallthru
      _
    %p100 = scmp.eq.s32.totalorder 0, 0
    // Predicated region
    $region46: #{tpu_custom_call.1} parent=1 // pred_check
      %p101 = pneg %p100
    $region47: #{tpu_custom_call.1} parent=1 // pred_check_branch
      %103 = sbr.rel (%p101) target = $region49
    $region48: #{tpu_custom_call.1} parent=1 // pred_region
      %104 = vst [vmem:[#allocation2] sm:$0xff] 0.0
      %105 = vst [vmem:[#allocation3] sm:$0xff] 0.0
    $region49: #{tpu_custom_call.1} parent=1 // pred_fallthru
      _
    %v106 = vld [vmem:[#allocation5] sm:$0xff]
    %v107 = vld [vmem:[#allocation5 + $0x8] sm:$0xff]
    %v108 = vld [vmem:[#allocation5 + $0x10] sm:$0xff]
    %v109 = vld [vmem:[#allocation5 + $0x18] sm:$0xff]
    %v110 = vld [vmem:[#allocation5 + $0x20] sm:$0xff]
    %v111 = vld [vmem:[#allocation5 + $0x28] sm:$0xff]
    %v112 = vld [vmem:[#allocation5 + $0x30] sm:$0xff]
    %v113 = vld [vmem:[#allocation5 + $0x38] sm:$0xff]
    %v114 = vld [vmem:[#allocation8] sm:$0xff]
    %v115 = vld [vmem:[#allocation8 + $0x8] sm:$0xff]
    %v116 = vld [vmem:[#allocation8 + $0x10] sm:$0xff]
    %v117 = vld [vmem:[#allocation8 + $0x18] sm:$0xff]
    %v118 = vld [vmem:[#allocation8 + $0x20] sm:$0xff]
    %v119 = vld [vmem:[#allocation8 + $0x28] sm:$0xff]
    %v120 = vld [vmem:[#allocation8 + $0x30] sm:$0xff]
    %v121 = vld [vmem:[#allocation8 + $0x38] sm:$0xff]
    %v122 = vld [vmem:[#allocation10] sm:$0xf]
    %v124 = vperm.slane %v122, 0
    %v125 = vperm.slane %v122, 1
    %v126 = vperm.slane %v122, 2
    %v127 = vperm.slane %v122, 3
    %vm132 = vcmask 130048
    %v134 = vsel %vm132, %v106, 0
    %v137 = vsel %vm132, %v107, 0
    %v140 = vsel %vm132, %v108, 0
    %v143 = vsel %vm132, %v109, 0
    %v146 = vsel %vm132, %v110, 0
    %v149 = vsel %vm132, %v111, 0
    %v152 = vsel %vm132, %v112, 0
    %v155 = vsel %vm132, %v113, 0
    %157 = vmatpush.msra.mxu0 0.0
    %158 = vmatpush.msra.mxu0 0.0
    %159 = vmatpush.msra.mxu0 0.0
    %160 = vmatpush.msra.mxu0 0.0
    %161 = vmatpush.msra.mxu0 0.0
    %162 = vmatpush.msra.mxu0 0.0
    %163 = vmatpush.msra.mxu0 0.0
    %164 = vmatpush.msra.mxu0 0.0
    %165 = vmatpush.msra.mxu0 0.0
    %166 = vmatpush.msra.mxu0 0.0
    %167 = vmatpush.msra.mxu0 0.0
    %168 = vmatpush.msra.mxu0 0.0
    %169 = vmatpush.msra.mxu0 0.0
    %170 = vmatpush.msra.mxu0 0.0
    %171 = vmatpush.msra.mxu0 %v118
    %172 = vmatpush.msra.mxu0 %v114
    %173 = vmatmul.f32.gmra.mxu0 %v134
    %v174 = vpop.f32.mrf.mxu0
    %v175 = vadd.f32 %v124, %v174
    %176 = vmatmul.f32.gmra.mxu0 %v137
    %v177 = vpop.f32.mrf.mxu0
    %v178 = vadd.f32 %v124, %v177
    %179 = vmatmul.f32.gmra.mxu0 %v140
    %v180 = vpop.f32.mrf.mxu0
    %v181 = vadd.f32 %v124, %v180
    %182 = vmatmul.f32.gmra.mxu0 %v143
    %v183 = vpop.f32.mrf.mxu0
    %v184 = vadd.f32 %v124, %v183
    %185 = vmatmul.f32.gmra.mxu0 %v146
    %v186 = vpop.f32.mrf.mxu0
    %v187 = vadd.f32 %v124, %v186
    %188 = vmatmul.f32.gmra.mxu0 %v149
    %v189 = vpop.f32.mrf.mxu0
    %v190 = vadd.f32 %v124, %v189
    %191 = vmatmul.f32.gmra.mxu0 %v152
    %v192 = vpop.f32.mrf.mxu0
    %v193 = vadd.f32 %v124, %v192
    %194 = vmatmul.f32.gmra.mxu0 %v155
    %v195 = vpop.f32.mrf.mxu0
    %v196 = vadd.f32 %v124, %v195
    %197 = vdwg.mxu0
    %198 = vmatpush.msra.mxu0 0.0
    %199 = vmatpush.msra.mxu0 0.0
    %200 = vmatpush.msra.mxu0 0.0
    %201 = vmatpush.msra.mxu0 0.0
    %202 = vmatpush.msra.mxu0 0.0
    %203 = vmatpush.msra.mxu0 0.0
    %204 = vmatpush.msra.mxu0 0.0
    %205 = vmatpush.msra.mxu0 0.0
    %206 = vmatpush.msra.mxu0 0.0
    %207 = vmatpush.msra.mxu0 0.0
    %208 = vmatpush.msra.mxu0 0.0
    %209 = vmatpush.msra.mxu0 0.0
    %210 = vmatpush.msra.mxu0 0.0
    %211 = vmatpush.msra.mxu0 0.0
    %212 = vmatpush.msra.mxu0 %v119
    %213 = vmatpush.msra.mxu0 %v115
    %214 = vmatmul.f32.gmra.mxu0 %v134
    %v215 = vpop.f32.mrf.mxu0
    %v216 = vadd.f32 %v125, %v215
    %217 = vmatmul.f32.gmra.mxu0 %v137
    %v218 = vpop.f32.mrf.mxu0
    %v219 = vadd.f32 %v125, %v218
    %220 = vmatmul.f32.gmra.mxu0 %v140
    %v221 = vpop.f32.mrf.mxu0
    %v222 = vadd.f32 %v125, %v221
    %223 = vmatmul.f32.gmra.mxu0 %v143
    %v224 = vpop.f32.mrf.mxu0
    %v225 = vadd.f32 %v125, %v224
    %226 = vmatmul.f32.gmra.mxu0 %v146
    %v227 = vpop.f32.mrf.mxu0
    %v228 = vadd.f32 %v125, %v227
    %229 = vmatmul.f32.gmra.mxu0 %v149
    %v230 = vpop.f32.mrf.mxu0
    %v231 = vadd.f32 %v125, %v230
    %232 = vmatmul.f32.gmra.mxu0 %v152
    %v233 = vpop.f32.mrf.mxu0
    %v234 = vadd.f32 %v125, %v233
    %235 = vmatmul.f32.gmra.mxu0 %v155
    %v236 = vpop.f32.mrf.mxu0
    %v237 = vadd.f32 %v125, %v236
    %238 = vdwg.mxu0
    %239 = vmatpush.msra.mxu0 0.0
    %240 = vmatpush.msra.mxu0 0.0
    %241 = vmatpush.msra.mxu0 0.0
    %242 = vmatpush.msra.mxu0 0.0
    %243 = vmatpush.msra.mxu0 0.0
    %244 = vmatpush.msra.mxu0 0.0
    %245 = vmatpush.msra.mxu0 0.0
    %246 = vmatpush.msra.mxu0 0.0
    %247 = vmatpush.msra.mxu0 0.0
    %248 = vmatpush.msra.mxu0 0.0
    %249 = vmatpush.msra.mxu0 0.0
    %250 = vmatpush.msra.mxu0 0.0
    %251 = vmatpush.msra.mxu0 0.0
    %252 = vmatpush.msra.mxu0 0.0
    %253 = vmatpush.msra.mxu0 %v120
    %254 = vmatpush.msra.mxu0 %v116
    %255 = vmatmul.f32.gmra.mxu0 %v134
    %v256 = vpop.f32.mrf.mxu0
    %v257 = vadd.f32 %v126, %v256
    %258 = vmatmul.f32.gmra.mxu0 %v137
    %v259 = vpop.f32.mrf.mxu0
    %v260 = vadd.f32 %v126, %v259
    %261 = vmatmul.f32.gmra.mxu0 %v140
    %v262 = vpop.f32.mrf.mxu0
    %v263 = vadd.f32 %v126, %v262
    %264 = vmatmul.f32.gmra.mxu0 %v143
    %v265 = vpop.f32.mrf.mxu0
    %v266 = vadd.f32 %v126, %v265
    %267 = vmatmul.f32.gmra.mxu0 %v146
    %v268 = vpop.f32.mrf.mxu0
    %v269 = vadd.f32 %v126, %v268
    %270 = vmatmul.f32.gmra.mxu0 %v149
    %v271 = vpop.f32.mrf.mxu0
    %v272 = vadd.f32 %v126, %v271
    %273 = vmatmul.f32.gmra.mxu0 %v152
    %v274 = vpop.f32.mrf.mxu0
    %v275 = vadd.f32 %v126, %v274
    %276 = vmatmul.f32.gmra.mxu0 %v155
    %v277 = vpop.f32.mrf.mxu0
    %v278 = vadd.f32 %v126, %v277
    %279 = vdwg.mxu0
    %280 = vmatpush.msra.mxu0 0.0
    %281 = vmatpush.msra.mxu0 0.0
    %282 = vmatpush.msra.mxu0 0.0
    %283 = vmatpush.msra.mxu0 0.0
    %284 = vmatpush.msra.mxu0 0.0
    %285 = vmatpush.msra.mxu0 0.0
    %286 = vmatpush.msra.mxu0 0.0
    %287 = vmatpush.msra.mxu0 0.0
    %288 = vmatpush.msra.mxu0 0.0
    %289 = vmatpush.msra.mxu0 0.0
    %290 = vmatpush.msra.mxu0 0.0
    %291 = vmatpush.msra.mxu0 0.0
    %292 = vmatpush.msra.mxu0 0.0
    %293 = vmatpush.msra.mxu0 0.0
    %294 = vmatpush.msra.mxu0 %v121
    %295 = vmatpush.msra.mxu0 %v117
    %296 = vmatmul.f32.gmra.mxu0 %v134
    %v297 = vpop.f32.mrf.mxu0
    %v298 = vadd.f32 %v127, %v297
    %299 = vmatmul.f32.gmra.mxu0 %v137
    %v300 = vpop.f32.mrf.mxu0
    %v301 = vadd.f32 %v127, %v300
    %302 = vmatmul.f32.gmra.mxu0 %v140
    %v303 = vpop.f32.mrf.mxu0
    %v304 = vadd.f32 %v127, %v303
    %305 = vmatmul.f32.gmra.mxu0 %v143
    %v306 = vpop.f32.mrf.mxu0
    %v307 = vadd.f32 %v127, %v306
    %308 = vmatmul.f32.gmra.mxu0 %v146
    %v309 = vpop.f32.mrf.mxu0
    %v310 = vadd.f32 %v127, %v309
    %311 = vmatmul.f32.gmra.mxu0 %v149
    %v312 = vpop.f32.mrf.mxu0
    %v313 = vadd.f32 %v127, %v312
    %314 = vmatmul.f32.gmra.mxu0 %v152
    %v315 = vpop.f32.mrf.mxu0
    %v316 = vadd.f32 %v127, %v315
    %317 = vmatmul.f32.gmra.mxu0 %v155
    %v318 = vpop.f32.mrf.mxu0
    %v319 = vadd.f32 %v127, %v318
    %320 = vdwg.mxu0
    %321 = vst [vmem:[#allocation4] sm:$0xff] %v175
    %322 = vst [vmem:[#allocation4 + $0x8] sm:$0xff] %v216
    %323 = vst [vmem:[#allocation4 + $0x10] sm:$0xff] %v257
    %324 = vst [vmem:[#allocation4 + $0x18] sm:$0xff] %v298
    %325 = vst [vmem:[#allocation4 + $0x20] sm:$0xff] %v178
    %326 = vst [vmem:[#allocation4 + $0x28] sm:$0xff] %v219
    %327 = vst [vmem:[#allocation4 + $0x30] sm:$0xff] %v260
    %328 = vst [vmem:[#allocation4 + $0x38] sm:$0xff] %v301
    %329 = vst [vmem:[#allocation4 + $0x40] sm:$0xff] %v181
    %330 = vst [vmem:[#allocation4 + $0x48] sm:$0xff] %v222
    %331 = vst [vmem:[#allocation4 + $0x50] sm:$0xff] %v263
    %332 = vst [vmem:[#allocation4 + $0x58] sm:$0xff] %v304
    %333 = vst [vmem:[#allocation4 + $0x60] sm:$0xff] %v184
    %334 = vst [vmem:[#allocation4 + $0x68] sm:$0xff] %v225
    %335 = vst [vmem:[#allocation4 + $0x70] sm:$0xff] %v266
    %336 = vst [vmem:[#allocation4 + $0x78] sm:$0xff] %v307
    %337 = vst [vmem:[#allocation4 + $0x80] sm:$0xff] %v187
    %338 = vst [vmem:[#allocation4 + $0x88] sm:$0xff] %v228
    %339 = vst [vmem:[#allocation4 + $0x90] sm:$0xff] %v269
    %340 = vst [vmem:[#allocation4 + $0x98] sm:$0xff] %v310
    %341 = vst [vmem:[#allocation4 + $0xa0] sm:$0xff] %v190
    %342 = vst [vmem:[#allocation4 + $0xa8] sm:$0xff] %v231
    %343 = vst [vmem:[#allocation4 + $0xb0] sm:$0xff] %v272
    %344 = vst [vmem:[#allocation4 + $0xb8] sm:$0xff] %v313
    %345 = vst [vmem:[#allocation4 + $0xc0] sm:$0xff] %v193
    %346 = vst [vmem:[#allocation4 + $0xc8] sm:$0xff] %v234
    %347 = vst [vmem:[#allocation4 + $0xd0] sm:$0xff] %v275
    %348 = vst [vmem:[#allocation4 + $0xd8] sm:$0xff] %v316
    %349 = vst [vmem:[#allocation4 + $0xe0] sm:$0xff] %v196
    %350 = vst [vmem:[#allocation4 + $0xe8] sm:$0xff] %v237
    %351 = vst [vmem:[#allocation4 + $0xf0] sm:$0xff] %v278
    %352 = vst [vmem:[#allocation4 + $0xf8] sm:$0xff] %v319
    %v353 = vld [vmem:[#allocation2] sm:$0xff]
    %v354 = vld [vmem:[#allocation3] sm:$0xff]
    %v355 = vld [vmem:[#allocation4] sm:$0xff]
    %v356 = vld [vmem:[#allocation4 + $0x8] sm:$0xff]
    %v357 = vld [vmem:[#allocation4 + $0x10] sm:$0xff]
    %v358 = vld [vmem:[#allocation4 + $0x18] sm:$0xff]
    %v359 = vld [vmem:[#allocation11] sm:$0xff]
    %v360 = vld [vmem:[#allocation11 + $0x8] sm:$0xff]
    %v361 = vld [vmem:[#allocation11 + $0x10] sm:$0xff]
    %v362 = vld [vmem:[#allocation11 + $0x18] sm:$0xff]
    %v363 = vld [vmem:[#allocation11 + $0x20] sm:$0xff]
    %v364 = vld [vmem:[#allocation11 + $0x28] sm:$0xff]
    %v365 = vld [vmem:[#allocation11 + $0x30] sm:$0xff]
    %v366 = vld [vmem:[#allocation11 + $0x38] sm:$0xff]
    %v367 = vld [vmem:[#allocation11 + $0x40] sm:$0xff]
    %v368 = vld [vmem:[#allocation11 + $0x48] sm:$0xff]
    %v369 = vld [vmem:[#allocation11 + $0x50] sm:$0xff]
    %v370 = vld [vmem:[#allocation11 + $0x58] sm:$0xff]
    %v371 = vld [vmem:[#allocation11 + $0x60] sm:$0xff]
    %v372 = vld [vmem:[#allocation11 + $0x68] sm:$0xff]
    %v373 = vld [vmem:[#allocation11 + $0x70] sm:$0xff]
    %v374 = vld [vmem:[#allocation11 + $0x78] sm:$0xff]
    %v375 = vld [vmem:[#allocation11 + $0x80] sm:$0xff]
    %v376 = vld [vmem:[#allocation11 + $0x88] sm:$0xff]
    %v377 = vld [vmem:[#allocation11 + $0x90] sm:$0xff]
    %v378 = vld [vmem:[#allocation11 + $0x98] sm:$0xff]
    %v379 = vld [vmem:[#allocation11 + $0xa0] sm:$0xff]
    %v380 = vld [vmem:[#allocation11 + $0xa8] sm:$0xff]
    %v381 = vld [vmem:[#allocation11 + $0xb0] sm:$0xff]
    %v382 = vld [vmem:[#allocation11 + $0xb8] sm:$0xff]
    %v383 = vld [vmem:[#allocation11 + $0xc0] sm:$0xff]
    %v384 = vld [vmem:[#allocation11 + $0xc8] sm:$0xff]
    %v385 = vld [vmem:[#allocation11 + $0xd0] sm:$0xff]
    %v386 = vld [vmem:[#allocation11 + $0xd8] sm:$0xff]
    %v387 = vld [vmem:[#allocation11 + $0xe0] sm:$0xff]
    %v388 = vld [vmem:[#allocation11 + $0xe8] sm:$0xff]
    %v389 = vld [vmem:[#allocation11 + $0xf0] sm:$0xff]
    %v390 = vld [vmem:[#allocation11 + $0xf8] sm:$0xff]
    %v391 = vld [vmem:[#allocation11 + $0x100] sm:$0xff]
    %v392 = vld [vmem:[#allocation11 + $0x108] sm:$0xff]
    %v393 = vld [vmem:[#allocation11 + $0x110] sm:$0xff]
    %v394 = vld [vmem:[#allocation11 + $0x118] sm:$0xff]
    %v395 = vld [vmem:[#allocation11 + $0x120] sm:$0xff]
    %v396 = vld [vmem:[#allocation11 + $0x128] sm:$0xff]
    %v397 = vld [vmem:[#allocation11 + $0x130] sm:$0xff]
    %v398 = vld [vmem:[#allocation11 + $0x138] sm:$0xff]
    %v399 = vld [vmem:[#allocation11 + $0x140] sm:$0xff]
    %v400 = vld [vmem:[#allocation11 + $0x148] sm:$0xff]
    %v401 = vld [vmem:[#allocation11 + $0x150] sm:$0xff]
    %v402 = vld [vmem:[#allocation11 + $0x158] sm:$0xff]
    %v403 = vld [vmem:[#allocation11 + $0x160] sm:$0xff]
    %v404 = vld [vmem:[#allocation11 + $0x168] sm:$0xff]
    %v405 = vld [vmem:[#allocation11 + $0x170] sm:$0xff]
    %v406 = vld [vmem:[#allocation11 + $0x178] sm:$0xff]
    %v407 = vld [vmem:[#allocation11 + $0x180] sm:$0xff]
    %v408 = vld [vmem:[#allocation11 + $0x188] sm:$0xff]
    %v409 = vld [vmem:[#allocation11 + $0x190] sm:$0xff]
    %v410 = vld [vmem:[#allocation11 + $0x198] sm:$0xff]
    %v411 = vld [vmem:[#allocation11 + $0x1a0] sm:$0xff]
    %v412 = vld [vmem:[#allocation11 + $0x1a8] sm:$0xff]
    %v413 = vld [vmem:[#allocation11 + $0x1b0] sm:$0xff]
    %v414 = vld [vmem:[#allocation11 + $0x1b8] sm:$0xff]
    %v415 = vld [vmem:[#allocation11 + $0x1c0] sm:$0xff]
    %v416 = vld [vmem:[#allocation11 + $0x1c8] sm:$0xff]
    %v417 = vld [vmem:[#allocation11 + $0x1d0] sm:$0xff]
    %v418 = vld [vmem:[#allocation11 + $0x1d8] sm:$0xff]
    %v419 = vld [vmem:[#allocation11 + $0x1e0] sm:$0xff]
    %v420 = vld [vmem:[#allocation11 + $0x1e8] sm:$0xff]
    %v421 = vld [vmem:[#allocation11 + $0x1f0] sm:$0xff]
    %v422 = vld [vmem:[#allocation11 + $0x1f8] sm:$0xff]
    %423 = vmatpush.msra.mxu0 %v419
    %424 = vmatpush.msra.mxu0 %v415
    %425 = vmatpush.msra.mxu0 %v411
    %426 = vmatpush.msra.mxu0 %v407
    %427 = vmatpush.msra.mxu0 %v403
    %428 = vmatpush.msra.mxu0 %v399
    %429 = vmatpush.msra.mxu0 %v395
    %430 = vmatpush.msra.mxu0 %v391
    %431 = vmatpush.msra.mxu0 %v387
    %432 = vmatpush.msra.mxu0 %v383
    %433 = vmatpush.msra.mxu0 %v379
    %434 = vmatpush.msra.mxu0 %v375
    %435 = vmatpush.msra.mxu0 %v371
    %436 = vmatpush.msra.mxu0 %v367
    %437 = vmatpush.msra.mxu0 %v363
    %438 = vmatpush.msra.mxu0 %v359
    %439 = vmatmul.f32.gmra.mxu0 %v353
    %v440 = vpop.f32.mrf.mxu0
    %v441 = vadd.f32 0.0, %v440
    %442 = vdwg.mxu0
    %443 = vmatpush.msra.mxu0 %v420
    %444 = vmatpush.msra.mxu0 %v416
    %445 = vmatpush.msra.mxu0 %v412
    %446 = vmatpush.msra.mxu0 %v408
    %447 = vmatpush.msra.mxu0 %v404
    %448 = vmatpush.msra.mxu0 %v400
    %449 = vmatpush.msra.mxu0 %v396
    %450 = vmatpush.msra.mxu0 %v392
    %451 = vmatpush.msra.mxu0 %v388
    %452 = vmatpush.msra.mxu0 %v384
    %453 = vmatpush.msra.mxu0 %v380
    %454 = vmatpush.msra.mxu0 %v376
    %455 = vmatpush.msra.mxu0 %v372
    %456 = vmatpush.msra.mxu0 %v368
    %457 = vmatpush.msra.mxu0 %v364
    %458 = vmatpush.msra.mxu0 %v360
    %459 = vmatmul.f32.gmra.mxu0 %v353
    %v460 = vpop.f32.mrf.mxu0
    %v461 = vadd.f32 0.0, %v460
    %462 = vdwg.mxu0
    %463 = vmatpush.msra.mxu0 %v421
    %464 = vmatpush.msra.mxu0 %v417
    %465 = vmatpush.msra.mxu0 %v413
    %466 = vmatpush.msra.mxu0 %v409
    %467 = vmatpush.msra.mxu0 %v405
    %468 = vmatpush.msra.mxu0 %v401
    %469 = vmatpush.msra.mxu0 %v397
    %470 = vmatpush.msra.mxu0 %v393
    %471 = vmatpush.msra.mxu0 %v389
    %472 = vmatpush.msra.mxu0 %v385
    %473 = vmatpush.msra.mxu0 %v381
    %474 = vmatpush.msra.mxu0 %v377
    %475 = vmatpush.msra.mxu0 %v373
    %476 = vmatpush.msra.mxu0 %v369
    %477 = vmatpush.msra.mxu0 %v365
    %478 = vmatpush.msra.mxu0 %v361
    %479 = vmatmul.f32.gmra.mxu0 %v353
    %v480 = vpop.f32.mrf.mxu0
    %v481 = vadd.f32 0.0, %v480
    %482 = vdwg.mxu0
    %483 = vmatpush.msra.mxu0 %v422
    %484 = vmatpush.msra.mxu0 %v418
    %485 = vmatpush.msra.mxu0 %v414
    %486 = vmatpush.msra.mxu0 %v410
    %487 = vmatpush.msra.mxu0 %v406
    %488 = vmatpush.msra.mxu0 %v402
    %489 = vmatpush.msra.mxu0 %v398
    %490 = vmatpush.msra.mxu0 %v394
    %491 = vmatpush.msra.mxu0 %v390
    %492 = vmatpush.msra.mxu0 %v386
    %493 = vmatpush.msra.mxu0 %v382
    %494 = vmatpush.msra.mxu0 %v378
    %495 = vmatpush.msra.mxu0 %v374
    %496 = vmatpush.msra.mxu0 %v370
    %497 = vmatpush.msra.mxu0 %v366
    %498 = vmatpush.msra.mxu0 %v362
    %499 = vmatmul.f32.gmra.mxu0 %v353
    %v500 = vpop.f32.mrf.mxu0
    %v501 = vadd.f32 0.0, %v500
    %502 = vdwg.mxu0
    %v503 = vadd.f32 %v355, %v441
    %v504 = vadd.f32 %v356, %v461
    %v505 = vadd.f32 %v357, %v481
    %v506 = vadd.f32 %v358, %v501
    %v507 = vmul.f32 %v503, 0.5
    %v508 = vtanh.pop %v507
    %v509 = vmul.f32 %v508, 0.5
    %v510 = vadd.f32 %v509, 0.5
    %v511 = vmul.f32 %v504, 0.5
    %v512 = vtanh.pop %v511
    %v513 = vmul.f32 %v512, 0.5
    %v514 = vadd.f32 %v513, 0.5
    %v515 = vtanh.pop %v505
    %v516 = vmul.f32 %v506, 0.5
    %v517 = vtanh.pop %v516
    %v518 = vmul.f32 %v517, 0.5
    %v519 = vadd.f32 %v518, 0.5
    %v520 = vmul.f32 %v514, %v354
    %v521 = vmul.f32 %v510, %v515
    %v522 = vadd.f32 %v520, %v521
    %v523 = vtanh.pop %v522
    %v524 = vmul.f32 %v519, %v523
    %s525 = scalar_lea.vmem [#allocation4], 32
    %v526 = vld [vmem:[%s525] sm:$0xff]
    %v527 = vld [vmem:[%s525 + $0x8] sm:$0xff]
    %v528 = vld [vmem:[%s525 + $0x10] sm:$0xff]
    %v529 = vld [vmem:[%s525 + $0x18] sm:$0xff]
    %530 = vmatpush.msra.mxu0 %v419
    %531 = vmatpush.msra.mxu0 %v415
    %532 = vmatpush.msra.mxu0 %v411
    %533 = vmatpush.msra.mxu0 %v407
    %534 = vmatpush.msra.mxu0 %v403
    %535 = vmatpush.msra.mxu0 %v399
    %536 = vmatpush.msra.mxu0 %v395
    %537 = vmatpush.msra.mxu0 %v391
    %538 = vmatpush.msra.mxu0 %v387
    %539 = vmatpush.msra.mxu0 %v383
    %540 = vmatpush.msra.mxu0 %v379
    %541 = vmatpush.msra.mxu0 %v375
    %542 = vmatpush.msra.mxu0 %v371
    %543 = vmatpush.msra.mxu0 %v367
    %544 = vmatpush.msra.mxu0 %v363
    %545 = vmatpush.msra.mxu0 %v359
    %546 = vmatmul.f32.gmra.mxu0 %v524
    %v547 = vpop.f32.mrf.mxu0
    %v548 = vadd.f32 0.0, %v547
    %549 = vdwg.mxu0
    %550 = vmatpush.msra.mxu0 %v420
    %551 = vmatpush.msra.mxu0 %v416
    %552 = vmatpush.msra.mxu0 %v412
    %553 = vmatpush.msra.mxu0 %v408
    %554 = vmatpush.msra.mxu0 %v404
    %555 = vmatpush.msra.mxu0 %v400
    %556 = vmatpush.msra.mxu0 %v396
    %557 = vmatpush.msra.mxu0 %v392
    %558 = vmatpush.msra.mxu0 %v388
    %559 = vmatpush.msra.mxu0 %v384
    %560 = vmatpush.msra.mxu0 %v380
    %561 = vmatpush.msra.mxu0 %v376
    %562 = vmatpush.msra.mxu0 %v372
    %563 = vmatpush.msra.mxu0 %v368
    %564 = vmatpush.msra.mxu0 %v364
    %565 = vmatpush.msra.mxu0 %v360
    %566 = vmatmul.f32.gmra.mxu0 %v524
    %v567 = vpop.f32.mrf.mxu0
    %v568 = vadd.f32 0.0, %v567
    %569 = vdwg.mxu0
    %570 = vmatpush.msra.mxu0 %v421
    %571 = vmatpush.msra.mxu0 %v417
    %572 = vmatpush.msra.mxu0 %v413
    %573 = vmatpush.msra.mxu0 %v409
    %574 = vmatpush.msra.mxu0 %v405
    %575 = vmatpush.msra.mxu0 %v401
    %576 = vmatpush.msra.mxu0 %v397
    %577 = vmatpush.msra.mxu0 %v393
    %578 = vmatpush.msra.mxu0 %v389
    %579 = vmatpush.msra.mxu0 %v385
    %580 = vmatpush.msra.mxu0 %v381
    %581 = vmatpush.msra.mxu0 %v377
    %582 = vmatpush.msra.mxu0 %v373
    %583 = vmatpush.msra.mxu0 %v369
    %584 = vmatpush.msra.mxu0 %v365
    %585 = vmatpush.msra.mxu0 %v361
    %586 = vmatmul.f32.gmra.mxu0 %v524
    %v587 = vpop.f32.mrf.mxu0
    %v588 = vadd.f32 0.0, %v587
    %589 = vdwg.mxu0
    %590 = vmatpush.msra.mxu0 %v422
    %591 = vmatpush.msra.mxu0 %v418
    %592 = vmatpush.msra.mxu0 %v414
    %593 = vmatpush.msra.mxu0 %v410
    %594 = vmatpush.msra.mxu0 %v406
    %595 = vmatpush.msra.mxu0 %v402
    %596 = vmatpush.msra.mxu0 %v398
    %597 = vmatpush.msra.mxu0 %v394
    %598 = vmatpush.msra.mxu0 %v390
    %599 = vmatpush.msra.mxu0 %v386
    %600 = vmatpush.msra.mxu0 %v382
    %601 = vmatpush.msra.mxu0 %v378
    %602 = vmatpush.msra.mxu0 %v374
    %603 = vmatpush.msra.mxu0 %v370
    %604 = vmatpush.msra.mxu0 %v366
    %605 = vmatpush.msra.mxu0 %v362
    %606 = vmatmul.f32.gmra.mxu0 %v524
    %v607 = vpop.f32.mrf.mxu0
    %v608 = vadd.f32 0.0, %v607
    %609 = vdwg.mxu0
    %v610 = vadd.f32 %v526, %v548
    %v611 = vadd.f32 %v527, %v568
    %v612 = vadd.f32 %v528, %v588
    %v613 = vadd.f32 %v529, %v608
    %v614 = vmul.f32 %v610, 0.5
    %v615 = vtanh.pop %v614
    %v616 = vmul.f32 %v615, 0.5
    %v617 = vadd.f32 %v616, 0.5
    %v618 = vmul.f32 %v611, 0.5
    %v619 = vtanh.pop %v618
    %v620 = vmul.f32 %v619, 0.5
    %v621 = vadd.f32 %v620, 0.5
    %v622 = vtanh.pop %v612
    %v623 = vmul.f32 %v613, 0.5
    %v624 = vtanh.pop %v623
    %v625 = vmul.f32 %v624, 0.5
    %v626 = vadd.f32 %v625, 0.5
    %v627 = vmul.f32 %v621, %v522
    %v628 = vmul.f32 %v617, %v622
    %v629 = vadd.f32 %v627, %v628
    %v630 = vtanh.pop %v629
    %v631 = vmul.f32 %v626, %v630
    %s632 = scalar_lea.vmem [#allocation4], 64
    %v633 = vld [vmem:[%s632] sm:$0xff]
    %v634 = vld [vmem:[%s632 + $0x8] sm:$0xff]
    %v635 = vld [vmem:[%s632 + $0x10] sm:$0xff]
    %v636 = vld [vmem:[%s632 + $0x18] sm:$0xff]
    %637 = vmatpush.msra.mxu0 %v419
    %638 = vmatpush.msra.mxu0 %v415
    %639 = vmatpush.msra.mxu0 %v411
    %640 = vmatpush.msra.mxu0 %v407
    %641 = vmatpush.msra.mxu0 %v403
    %642 = vmatpush.msra.mxu0 %v399
    %643 = vmatpush.msra.mxu0 %v395
    %644 = vmatpush.msra.mxu0 %v391
    %645 = vmatpush.msra.mxu0 %v387
    %646 = vmatpush.msra.mxu0 %v383
    %647 = vmatpush.msra.mxu0 %v379
    %648 = vmatpush.msra.mxu0 %v375
    %649 = vmatpush.msra.mxu0 %v371
    %650 = vmatpush.msra.mxu0 %v367
    %651 = vmatpush.msra.mxu0 %v363
    %652 = vmatpush.msra.mxu0 %v359
    %653 = vmatmul.f32.gmra.mxu0 %v631
    %v654 = vpop.f32.mrf.mxu0
    %v655 = vadd.f32 0.0, %v654
    %656 = vdwg.mxu0
    %657 = vmatpush.msra.mxu0 %v420
    %658 = vmatpush.msra.mxu0 %v416
    %659 = vmatpush.msra.mxu0 %v412
    %660 = vmatpush.msra.mxu0 %v408
    %661 = vmatpush.msra.mxu0 %v404
    %662 = vmatpush.msra.mxu0 %v400
    %663 = vmatpush.msra.mxu0 %v396
    %664 = vmatpush.msra.mxu0 %v392
    %665 = vmatpush.msra.mxu0 %v388
    %666 = vmatpush.msra.mxu0 %v384
    %667 = vmatpush.msra.mxu0 %v380
    %668 = vmatpush.msra.mxu0 %v376
    %669 = vmatpush.msra.mxu0 %v372
    %670 = vmatpush.msra.mxu0 %v368
    %671 = vmatpush.msra.mxu0 %v364
    %672 = vmatpush.msra.mxu0 %v360
    %673 = vmatmul.f32.gmra.mxu0 %v631
    %v674 = vpop.f32.mrf.mxu0
    %v675 = vadd.f32 0.0, %v674
    %676 = vdwg.mxu0
    %677 = vmatpush.msra.mxu0 %v421
    %678 = vmatpush.msra.mxu0 %v417
    %679 = vmatpush.msra.mxu0 %v413
    %680 = vmatpush.msra.mxu0 %v409
    %681 = vmatpush.msra.mxu0 %v405
    %682 = vmatpush.msra.mxu0 %v401
    %683 = vmatpush.msra.mxu0 %v397
    %684 = vmatpush.msra.mxu0 %v393
    %685 = vmatpush.msra.mxu0 %v389
    %686 = vmatpush.msra.mxu0 %v385
    %687 = vmatpush.msra.mxu0 %v381
    %688 = vmatpush.msra.mxu0 %v377
    %689 = vmatpush.msra.mxu0 %v373
    %690 = vmatpush.msra.mxu0 %v369
    %691 = vmatpush.msra.mxu0 %v365
    %692 = vmatpush.msra.mxu0 %v361
    %693 = vmatmul.f32.gmra.mxu0 %v631
    %v694 = vpop.f32.mrf.mxu0
    %v695 = vadd.f32 0.0, %v694
    %696 = vdwg.mxu0
    %697 = vmatpush.msra.mxu0 %v422
    %698 = vmatpush.msra.mxu0 %v418
    %699 = vmatpush.msra.mxu0 %v414
    %700 = vmatpush.msra.mxu0 %v410
    %701 = vmatpush.msra.mxu0 %v406
    %702 = vmatpush.msra.mxu0 %v402
    %703 = vmatpush.msra.mxu0 %v398
    %704 = vmatpush.msra.mxu0 %v394
    %705 = vmatpush.msra.mxu0 %v390
    %706 = vmatpush.msra.mxu0 %v386
    %707 = vmatpush.msra.mxu0 %v382
    %708 = vmatpush.msra.mxu0 %v378
    %709 = vmatpush.msra.mxu0 %v374
    %710 = vmatpush.msra.mxu0 %v370
    %711 = vmatpush.msra.mxu0 %v366
    %712 = vmatpush.msra.mxu0 %v362
    %713 = vmatmul.f32.gmra.mxu0 %v631
    %v714 = vpop.f32.mrf.mxu0
    %v715 = vadd.f32 0.0, %v714
    %716 = vdwg.mxu0
    %v717 = vadd.f32 %v633, %v655
    %v718 = vadd.f32 %v634, %v675
    %v719 = vadd.f32 %v635, %v695
    %v720 = vadd.f32 %v636, %v715
    %v721 = vmul.f32 %v717, 0.5
    %v722 = vtanh.pop %v721
    %v723 = vmul.f32 %v722, 0.5
    %v724 = vadd.f32 %v723, 0.5
    %v725 = vmul.f32 %v718, 0.5
    %v726 = vtanh.pop %v725
    %v727 = vmul.f32 %v726, 0.5
    %v728 = vadd.f32 %v727, 0.5
    %v729 = vtanh.pop %v719
    %v730 = vmul.f32 %v720, 0.5
    %v731 = vtanh.pop %v730
    %v732 = vmul.f32 %v731, 0.5
    %v733 = vadd.f32 %v732, 0.5
    %v734 = vmul.f32 %v728, %v629
    %v735 = vmul.f32 %v724, %v729
    %v736 = vadd.f32 %v734, %v735
    %v737 = vtanh.pop %v736
    %v738 = vmul.f32 %v733, %v737
    %s739 = scalar_lea.vmem [#allocation4], 96
    %v740 = vld [vmem:[%s739] sm:$0xff]
    %v741 = vld [vmem:[%s739 + $0x8] sm:$0xff]
    %v742 = vld [vmem:[%s739 + $0x10] sm:$0xff]
    %v743 = vld [vmem:[%s739 + $0x18] sm:$0xff]
    %744 = vmatpush.msra.mxu0 %v419
    %745 = vmatpush.msra.mxu0 %v415
    %746 = vmatpush.msra.mxu0 %v411
    %747 = vmatpush.msra.mxu0 %v407
    %748 = vmatpush.msra.mxu0 %v403
    %749 = vmatpush.msra.mxu0 %v399
    %750 = vmatpush.msra.mxu0 %v395
    %751 = vmatpush.msra.mxu0 %v391
    %752 = vmatpush.msra.mxu0 %v387
    %753 = vmatpush.msra.mxu0 %v383
    %754 = vmatpush.msra.mxu0 %v379
    %755 = vmatpush.msra.mxu0 %v375
    %756 = vmatpush.msra.mxu0 %v371
    %757 = vmatpush.msra.mxu0 %v367
    %758 = vmatpush.msra.mxu0 %v363
    %759 = vmatpush.msra.mxu0 %v359
    %760 = vmatmul.f32.gmra.mxu0 %v738
    %v761 = vpop.f32.mrf.mxu0
    %v762 = vadd.f32 0.0, %v761
    %763 = vdwg.mxu0
    %764 = vmatpush.msra.mxu0 %v420
    %765 = vmatpush.msra.mxu0 %v416
    %766 = vmatpush.msra.mxu0 %v412
    %767 = vmatpush.msra.mxu0 %v408
    %768 = vmatpush.msra.mxu0 %v404
    %769 = vmatpush.msra.mxu0 %v400
    %770 = vmatpush.msra.mxu0 %v396
    %771 = vmatpush.msra.mxu0 %v392
    %772 = vmatpush.msra.mxu0 %v388
    %773 = vmatpush.msra.mxu0 %v384
    %774 = vmatpush.msra.mxu0 %v380
    %775 = vmatpush.msra.mxu0 %v376
    %776 = vmatpush.msra.mxu0 %v372
    %777 = vmatpush.msra.mxu0 %v368
    %778 = vmatpush.msra.mxu0 %v364
    %779 = vmatpush.msra.mxu0 %v360
    %780 = vmatmul.f32.gmra.mxu0 %v738
    %v781 = vpop.f32.mrf.mxu0
    %v782 = vadd.f32 0.0, %v781
    %783 = vdwg.mxu0
    %784 = vmatpush.msra.mxu0 %v421
    %785 = vmatpush.msra.mxu0 %v417
    %786 = vmatpush.msra.mxu0 %v413
    %787 = vmatpush.msra.mxu0 %v409
    %788 = vmatpush.msra.mxu0 %v405
    %789 = vmatpush.msra.mxu0 %v401
    %790 = vmatpush.msra.mxu0 %v397
    %791 = vmatpush.msra.mxu0 %v393
    %792 = vmatpush.msra.mxu0 %v389
    %793 = vmatpush.msra.mxu0 %v385
    %794 = vmatpush.msra.mxu0 %v381
    %795 = vmatpush.msra.mxu0 %v377
    %796 = vmatpush.msra.mxu0 %v373
    %797 = vmatpush.msra.mxu0 %v369
    %798 = vmatpush.msra.mxu0 %v365
    %799 = vmatpush.msra.mxu0 %v361
    %800 = vmatmul.f32.gmra.mxu0 %v738
    %v801 = vpop.f32.mrf.mxu0
    %v802 = vadd.f32 0.0, %v801
    %803 = vdwg.mxu0
    %804 = vmatpush.msra.mxu0 %v422
    %805 = vmatpush.msra.mxu0 %v418
    %806 = vmatpush.msra.mxu0 %v414
    %807 = vmatpush.msra.mxu0 %v410
    %808 = vmatpush.msra.mxu0 %v406
    %809 = vmatpush.msra.mxu0 %v402
    %810 = vmatpush.msra.mxu0 %v398
    %811 = vmatpush.msra.mxu0 %v394
    %812 = vmatpush.msra.mxu0 %v390
    %813 = vmatpush.msra.mxu0 %v386
    %814 = vmatpush.msra.mxu0 %v382
    %815 = vmatpush.msra.mxu0 %v378
    %816 = vmatpush.msra.mxu0 %v374
    %817 = vmatpush.msra.mxu0 %v370
    %818 = vmatpush.msra.mxu0 %v366
    %819 = vmatpush.msra.mxu0 %v362
    %820 = vmatmul.f32.gmra.mxu0 %v738
    %v821 = vpop.f32.mrf.mxu0
    %v822 = vadd.f32 0.0, %v821
    %823 = vdwg.mxu0
    %v824 = vadd.f32 %v740, %v762
    %v825 = vadd.f32 %v741, %v782
    %v826 = vadd.f32 %v742, %v802
    %v827 = vadd.f32 %v743, %v822
    %v828 = vmul.f32 %v824, 0.5
    %v829 = vtanh.pop %v828
    %v830 = vmul.f32 %v829, 0.5
    %v831 = vadd.f32 %v830, 0.5
    %v832 = vmul.f32 %v825, 0.5
    %v833 = vtanh.pop %v832
    %v834 = vmul.f32 %v833, 0.5
    %v835 = vadd.f32 %v834, 0.5
    %v836 = vtanh.pop %v826
    %v837 = vmul.f32 %v827, 0.5
    %v838 = vtanh.pop %v837
    %v839 = vmul.f32 %v838, 0.5
    %v840 = vadd.f32 %v839, 0.5
    %v841 = vmul.f32 %v835, %v736
    %v842 = vmul.f32 %v831, %v836
    %v843 = vadd.f32 %v841, %v842
    %v844 = vtanh.pop %v843
    %v845 = vmul.f32 %v840, %v844
    %s846 = scalar_lea.vmem [#allocation4], 128
    %v847 = vld [vmem:[%s846] sm:$0xff]
    %v848 = vld [vmem:[%s846 + $0x8] sm:$0xff]
    %v849 = vld [vmem:[%s846 + $0x10] sm:$0xff]
    %v850 = vld [vmem:[%s846 + $0x18] sm:$0xff]
    %851 = vmatpush.msra.mxu0 %v419
    %852 = vmatpush.msra.mxu0 %v415
    %853 = vmatpush.msra.mxu0 %v411
    %854 = vmatpush.msra.mxu0 %v407
    %855 = vmatpush.msra.mxu0 %v403
    %856 = vmatpush.msra.mxu0 %v399
    %857 = vmatpush.msra.mxu0 %v395
    %858 = vmatpush.msra.mxu0 %v391
    %859 = vmatpush.msra.mxu0 %v387
    %860 = vmatpush.msra.mxu0 %v383
    %861 = vmatpush.msra.mxu0 %v379
    %862 = vmatpush.msra.mxu0 %v375
    %863 = vmatpush.msra.mxu0 %v371
    %864 = vmatpush.msra.mxu0 %v367
    %865 = vmatpush.msra.mxu0 %v363
    %866 = vmatpush.msra.mxu0 %v359
    %867 = vmatmul.f32.gmra.mxu0 %v845
    %v868 = vpop.f32.mrf.mxu0
    %v869 = vadd.f32 0.0, %v868
    %870 = vdwg.mxu0
    %871 = vmatpush.msra.mxu0 %v420
    %872 = vmatpush.msra.mxu0 %v416
    %873 = vmatpush.msra.mxu0 %v412
    %874 = vmatpush.msra.mxu0 %v408
    %875 = vmatpush.msra.mxu0 %v404
    %876 = vmatpush.msra.mxu0 %v400
    %877 = vmatpush.msra.mxu0 %v396
    %878 = vmatpush.msra.mxu0 %v392
    %879 = vmatpush.msra.mxu0 %v388
    %880 = vmatpush.msra.mxu0 %v384
    %881 = vmatpush.msra.mxu0 %v380
    %882 = vmatpush.msra.mxu0 %v376
    %883 = vmatpush.msra.mxu0 %v372
    %884 = vmatpush.msra.mxu0 %v368
    %885 = vmatpush.msra.mxu0 %v364
    %886 = vmatpush.msra.mxu0 %v360
    %887 = vmatmul.f32.gmra.mxu0 %v845
    %v888 = vpop.f32.mrf.mxu0
    %v889 = vadd.f32 0.0, %v888
    %890 = vdwg.mxu0
    %891 = vmatpush.msra.mxu0 %v421
    %892 = vmatpush.msra.mxu0 %v417
    %893 = vmatpush.msra.mxu0 %v413
    %894 = vmatpush.msra.mxu0 %v409
    %895 = vmatpush.msra.mxu0 %v405
    %896 = vmatpush.msra.mxu0 %v401
    %897 = vmatpush.msra.mxu0 %v397
    %898 = vmatpush.msra.mxu0 %v393
    %899 = vmatpush.msra.mxu0 %v389
    %900 = vmatpush.msra.mxu0 %v385
    %901 = vmatpush.msra.mxu0 %v381
    %902 = vmatpush.msra.mxu0 %v377
    %903 = vmatpush.msra.mxu0 %v373
    %904 = vmatpush.msra.mxu0 %v369
    %905 = vmatpush.msra.mxu0 %v365
    %906 = vmatpush.msra.mxu0 %v361
    %907 = vmatmul.f32.gmra.mxu0 %v845
    %v908 = vpop.f32.mrf.mxu0
    %v909 = vadd.f32 0.0, %v908
    %910 = vdwg.mxu0
    %911 = vmatpush.msra.mxu0 %v422
    %912 = vmatpush.msra.mxu0 %v418
    %913 = vmatpush.msra.mxu0 %v414
    %914 = vmatpush.msra.mxu0 %v410
    %915 = vmatpush.msra.mxu0 %v406
    %916 = vmatpush.msra.mxu0 %v402
    %917 = vmatpush.msra.mxu0 %v398
    %918 = vmatpush.msra.mxu0 %v394
    %919 = vmatpush.msra.mxu0 %v390
    %920 = vmatpush.msra.mxu0 %v386
    %921 = vmatpush.msra.mxu0 %v382
    %922 = vmatpush.msra.mxu0 %v378
    %923 = vmatpush.msra.mxu0 %v374
    %924 = vmatpush.msra.mxu0 %v370
    %925 = vmatpush.msra.mxu0 %v366
    %926 = vmatpush.msra.mxu0 %v362
    %927 = vmatmul.f32.gmra.mxu0 %v845
    %v928 = vpop.f32.mrf.mxu0
    %v929 = vadd.f32 0.0, %v928
    %930 = vdwg.mxu0
    %v931 = vadd.f32 %v847, %v869
    %v932 = vadd.f32 %v848, %v889
    %v933 = vadd.f32 %v849, %v909
    %v934 = vadd.f32 %v850, %v929
    %v935 = vmul.f32 %v931, 0.5
    %v936 = vtanh.pop %v935
    %v937 = vmul.f32 %v936, 0.5
    %v938 = vadd.f32 %v937, 0.5
    %v939 = vmul.f32 %v932, 0.5
    %v940 = vtanh.pop %v939
    %v941 = vmul.f32 %v940, 0.5
    %v942 = vadd.f32 %v941, 0.5
    %v943 = vtanh.pop %v933
    %v944 = vmul.f32 %v934, 0.5
    %v945 = vtanh.pop %v944
    %v946 = vmul.f32 %v945, 0.5
    %v947 = vadd.f32 %v946, 0.5
    %v948 = vmul.f32 %v942, %v843
    %v949 = vmul.f32 %v938, %v943
    %v950 = vadd.f32 %v948, %v949
    %v951 = vtanh.pop %v950
    %v952 = vmul.f32 %v947, %v951
    %s953 = scalar_lea.vmem [#allocation4], 160
    %v954 = vld [vmem:[%s953] sm:$0xff]
    %v955 = vld [vmem:[%s953 + $0x8] sm:$0xff]
    %v956 = vld [vmem:[%s953 + $0x10] sm:$0xff]
    %v957 = vld [vmem:[%s953 + $0x18] sm:$0xff]
    %958 = vmatpush.msra.mxu0 %v419
    %959 = vmatpush.msra.mxu0 %v415
    %960 = vmatpush.msra.mxu0 %v411
    %961 = vmatpush.msra.mxu0 %v407
    %962 = vmatpush.msra.mxu0 %v403
    %963 = vmatpush.msra.mxu0 %v399
    %964 = vmatpush.msra.mxu0 %v395
    %965 = vmatpush.msra.mxu0 %v391
    %966 = vmatpush.msra.mxu0 %v387
    %967 = vmatpush.msra.mxu0 %v383
    %968 = vmatpush.msra.mxu0 %v379
    %969 = vmatpush.msra.mxu0 %v375
    %970 = vmatpush.msra.mxu0 %v371
    %971 = vmatpush.msra.mxu0 %v367
    %972 = vmatpush.msra.mxu0 %v363
    %973 = vmatpush.msra.mxu0 %v359
    %974 = vmatmul.f32.gmra.mxu0 %v952
    %v975 = vpop.f32.mrf.mxu0
    %v976 = vadd.f32 0.0, %v975
    %977 = vdwg.mxu0
    %978 = vmatpush.msra.mxu0 %v420
    %979 = vmatpush.msra.mxu0 %v416
    %980 = vmatpush.msra.mxu0 %v412
    %981 = vmatpush.msra.mxu0 %v408
    %982 = vmatpush.msra.mxu0 %v404
    %983 = vmatpush.msra.mxu0 %v400
    %984 = vmatpush.msra.mxu0 %v396
    %985 = vmatpush.msra.mxu0 %v392
    %986 = vmatpush.msra.mxu0 %v388
    %987 = vmatpush.msra.mxu0 %v384
    %988 = vmatpush.msra.mxu0 %v380
    %989 = vmatpush.msra.mxu0 %v376
    %990 = vmatpush.msra.mxu0 %v372
    %991 = vmatpush.msra.mxu0 %v368
    %992 = vmatpush.msra.mxu0 %v364
    %993 = vmatpush.msra.mxu0 %v360
    %994 = vmatmul.f32.gmra.mxu0 %v952
    %v995 = vpop.f32.mrf.mxu0
    %v996 = vadd.f32 0.0, %v995
    %997 = vdwg.mxu0
    %998 = vmatpush.msra.mxu0 %v421
    %999 = vmatpush.msra.mxu0 %v417
    %1000 = vmatpush.msra.mxu0 %v413
    %1001 = vmatpush.msra.mxu0 %v409
    %1002 = vmatpush.msra.mxu0 %v405
    %1003 = vmatpush.msra.mxu0 %v401
    %1004 = vmatpush.msra.mxu0 %v397
    %1005 = vmatpush.msra.mxu0 %v393
    %1006 = vmatpush.msra.mxu0 %v389
    %1007 = vmatpush.msra.mxu0 %v385
    %1008 = vmatpush.msra.mxu0 %v381
    %1009 = vmatpush.msra.mxu0 %v377
    %1010 = vmatpush.msra.mxu0 %v373
    %1011 = vmatpush.msra.mxu0 %v369
    %1012 = vmatpush.msra.mxu0 %v365
    %1013 = vmatpush.msra.mxu0 %v361
    %1014 = vmatmul.f32.gmra.mxu0 %v952
    %v1015 = vpop.f32.mrf.mxu0
    %v1016 = vadd.f32 0.0, %v1015
    %1017 = vdwg.mxu0
    %1018 = vmatpush.msra.mxu0 %v422
    %1019 = vmatpush.msra.mxu0 %v418
    %1020 = vmatpush.msra.mxu0 %v414
    %1021 = vmatpush.msra.mxu0 %v410
    %1022 = vmatpush.msra.mxu0 %v406
    %1023 = vmatpush.msra.mxu0 %v402
    %1024 = vmatpush.msra.mxu0 %v398
    %1025 = vmatpush.msra.mxu0 %v394
    %1026 = vmatpush.msra.mxu0 %v390
    %1027 = vmatpush.msra.mxu0 %v386
    %1028 = vmatpush.msra.mxu0 %v382
    %1029 = vmatpush.msra.mxu0 %v378
    %1030 = vmatpush.msra.mxu0 %v374
    %1031 = vmatpush.msra.mxu0 %v370
    %1032 = vmatpush.msra.mxu0 %v366
    %1033 = vmatpush.msra.mxu0 %v362
    %1034 = vmatmul.f32.gmra.mxu0 %v952
    %v1035 = vpop.f32.mrf.mxu0
    %v1036 = vadd.f32 0.0, %v1035
    %1037 = vdwg.mxu0
    %v1038 = vadd.f32 %v954, %v976
    %v1039 = vadd.f32 %v955, %v996
    %v1040 = vadd.f32 %v956, %v1016
    %v1041 = vadd.f32 %v957, %v1036
    %v1042 = vmul.f32 %v1038, 0.5
    %v1043 = vtanh.pop %v1042
    %v1044 = vmul.f32 %v1043, 0.5
    %v1045 = vadd.f32 %v1044, 0.5
    %v1046 = vmul.f32 %v1039, 0.5
    %v1047 = vtanh.pop %v1046
    %v1048 = vmul.f32 %v1047, 0.5
    %v1049 = vadd.f32 %v1048, 0.5
    %v1050 = vtanh.pop %v1040
    %v1051 = vmul.f32 %v1041, 0.5
    %v1052 = vtanh.pop %v1051
    %v1053 = vmul.f32 %v1052, 0.5
    %v1054 = vadd.f32 %v1053, 0.5
    %v1055 = vmul.f32 %v1049, %v950
    %v1056 = vmul.f32 %v1045, %v1050
    %v1057 = vadd.f32 %v1055, %v1056
    %v1058 = vtanh.pop %v1057
    %v1059 = vmul.f32 %v1054, %v1058
    %s1060 = scalar_lea.vmem [#allocation4], 192
    %v1061 = vld [vmem:[%s1060] sm:$0xff]
    %v1062 = vld [vmem:[%s1060 + $0x8] sm:$0xff]
    %v1063 = vld [vmem:[%s1060 + $0x10] sm:$0xff]
    %v1064 = vld [vmem:[%s1060 + $0x18] sm:$0xff]
    %1065 = vmatpush.msra.mxu0 %v419
    %1066 = vmatpush.msra.mxu0 %v415
    %1067 = vmatpush.msra.mxu0 %v411
    %1068 = vmatpush.msra.mxu0 %v407
    %1069 = vmatpush.msra.mxu0 %v403
    %1070 = vmatpush.msra.mxu0 %v399
    %1071 = vmatpush.msra.mxu0 %v395
    %1072 = vmatpush.msra.mxu0 %v391
    %1073 = vmatpush.msra.mxu0 %v387
    %1074 = vmatpush.msra.mxu0 %v383
    %1075 = vmatpush.msra.mxu0 %v379
    %1076 = vmatpush.msra.mxu0 %v375
    %1077 = vmatpush.msra.mxu0 %v371
    %1078 = vmatpush.msra.mxu0 %v367
    %1079 = vmatpush.msra.mxu0 %v363
    %1080 = vmatpush.msra.mxu0 %v359
    %1081 = vmatmul.f32.gmra.mxu0 %v1059
    %v1082 = vpop.f32.mrf.mxu0
    %v1083 = vadd.f32 0.0, %v1082
    %1084 = vdwg.mxu0
    %1085 = vmatpush.msra.mxu0 %v420
    %1086 = vmatpush.msra.mxu0 %v416
    %1087 = vmatpush.msra.mxu0 %v412
    %1088 = vmatpush.msra.mxu0 %v408
    %1089 = vmatpush.msra.mxu0 %v404
    %1090 = vmatpush.msra.mxu0 %v400
    %1091 = vmatpush.msra.mxu0 %v396
    %1092 = vmatpush.msra.mxu0 %v392
    %1093 = vmatpush.msra.mxu0 %v388
    %1094 = vmatpush.msra.mxu0 %v384
    %1095 = vmatpush.msra.mxu0 %v380
    %1096 = vmatpush.msra.mxu0 %v376
    %1097 = vmatpush.msra.mxu0 %v372
    %1098 = vmatpush.msra.mxu0 %v368
    %1099 = vmatpush.msra.mxu0 %v364
    %1100 = vmatpush.msra.mxu0 %v360
    %1101 = vmatmul.f32.gmra.mxu0 %v1059
    %v1102 = vpop.f32.mrf.mxu0
    %v1103 = vadd.f32 0.0, %v1102
    %1104 = vdwg.mxu0
    %1105 = vmatpush.msra.mxu0 %v421
    %1106 = vmatpush.msra.mxu0 %v417
    %1107 = vmatpush.msra.mxu0 %v413
    %1108 = vmatpush.msra.mxu0 %v409
    %1109 = vmatpush.msra.mxu0 %v405
    %1110 = vmatpush.msra.mxu0 %v401
    %1111 = vmatpush.msra.mxu0 %v397
    %1112 = vmatpush.msra.mxu0 %v393
    %1113 = vmatpush.msra.mxu0 %v389
    %1114 = vmatpush.msra.mxu0 %v385
    %1115 = vmatpush.msra.mxu0 %v381
    %1116 = vmatpush.msra.mxu0 %v377
    %1117 = vmatpush.msra.mxu0 %v373
    %1118 = vmatpush.msra.mxu0 %v369
    %1119 = vmatpush.msra.mxu0 %v365
    %1120 = vmatpush.msra.mxu0 %v361
    %1121 = vmatmul.f32.gmra.mxu0 %v1059
    %v1122 = vpop.f32.mrf.mxu0
    %v1123 = vadd.f32 0.0, %v1122
    %1124 = vdwg.mxu0
    %1125 = vmatpush.msra.mxu0 %v422
    %1126 = vmatpush.msra.mxu0 %v418
    %1127 = vmatpush.msra.mxu0 %v414
    %1128 = vmatpush.msra.mxu0 %v410
    %1129 = vmatpush.msra.mxu0 %v406
    %1130 = vmatpush.msra.mxu0 %v402
    %1131 = vmatpush.msra.mxu0 %v398
    %1132 = vmatpush.msra.mxu0 %v394
    %1133 = vmatpush.msra.mxu0 %v390
    %1134 = vmatpush.msra.mxu0 %v386
    %1135 = vmatpush.msra.mxu0 %v382
    %1136 = vmatpush.msra.mxu0 %v378
    %1137 = vmatpush.msra.mxu0 %v374
    %1138 = vmatpush.msra.mxu0 %v370
    %1139 = vmatpush.msra.mxu0 %v366
    %1140 = vmatpush.msra.mxu0 %v362
    %1141 = vmatmul.f32.gmra.mxu0 %v1059
    %v1142 = vpop.f32.mrf.mxu0
    %v1143 = vadd.f32 0.0, %v1142
    %1144 = vdwg.mxu0
    %v1145 = vadd.f32 %v1061, %v1083
    %v1146 = vadd.f32 %v1062, %v1103
    %v1147 = vadd.f32 %v1063, %v1123
    %v1148 = vadd.f32 %v1064, %v1143
    %v1149 = vmul.f32 %v1145, 0.5
    %v1150 = vtanh.pop %v1149
    %v1151 = vmul.f32 %v1150, 0.5
    %v1152 = vadd.f32 %v1151, 0.5
    %v1153 = vmul.f32 %v1146, 0.5
    %v1154 = vtanh.pop %v1153
    %v1155 = vmul.f32 %v1154, 0.5
    %v1156 = vadd.f32 %v1155, 0.5
    %v1157 = vtanh.pop %v1147
    %v1158 = vmul.f32 %v1148, 0.5
    %v1159 = vtanh.pop %v1158
    %v1160 = vmul.f32 %v1159, 0.5
    %v1161 = vadd.f32 %v1160, 0.5
    %v1162 = vmul.f32 %v1156, %v1057
    %v1163 = vmul.f32 %v1152, %v1157
    %v1164 = vadd.f32 %v1162, %v1163
    %v1165 = vtanh.pop %v1164
    %v1166 = vmul.f32 %v1161, %v1165
    %s1167 = scalar_lea.vmem [#allocation4], 224
    %v1168 = vld [vmem:[%s1167] sm:$0xff]
    %v1169 = vld [vmem:[%s1167 + $0x8] sm:$0xff]
    %v1170 = vld [vmem:[%s1167 + $0x10] sm:$0xff]
    %v1171 = vld [vmem:[%s1167 + $0x18] sm:$0xff]
    %1172 = vmatpush.msra.mxu0 %v419
    %1173 = vmatpush.msra.mxu0 %v415
    %1174 = vmatpush.msra.mxu0 %v411
    %1175 = vmatpush.msra.mxu0 %v407
    %1176 = vmatpush.msra.mxu0 %v403
    %1177 = vmatpush.msra.mxu0 %v399
    %1178 = vmatpush.msra.mxu0 %v395
    %1179 = vmatpush.msra.mxu0 %v391
    %1180 = vmatpush.msra.mxu0 %v387
    %1181 = vmatpush.msra.mxu0 %v383
    %1182 = vmatpush.msra.mxu0 %v379
    %1183 = vmatpush.msra.mxu0 %v375
    %1184 = vmatpush.msra.mxu0 %v371
    %1185 = vmatpush.msra.mxu0 %v367
    %1186 = vmatpush.msra.mxu0 %v363
    %1187 = vmatpush.msra.mxu0 %v359
    %1188 = vmatmul.f32.gmra.mxu0 %v1166
    %v1189 = vpop.f32.mrf.mxu0
    %v1190 = vadd.f32 0.0, %v1189
    %1191 = vdwg.mxu0
    %1192 = vmatpush.msra.mxu0 %v420
    %1193 = vmatpush.msra.mxu0 %v416
    %1194 = vmatpush.msra.mxu0 %v412
    %1195 = vmatpush.msra.mxu0 %v408
    %1196 = vmatpush.msra.mxu0 %v404
    %1197 = vmatpush.msra.mxu0 %v400
    %1198 = vmatpush.msra.mxu0 %v396
    %1199 = vmatpush.msra.mxu0 %v392
    %1200 = vmatpush.msra.mxu0 %v388
    %1201 = vmatpush.msra.mxu0 %v384
    %1202 = vmatpush.msra.mxu0 %v380
    %1203 = vmatpush.msra.mxu0 %v376
    %1204 = vmatpush.msra.mxu0 %v372
    %1205 = vmatpush.msra.mxu0 %v368
    %1206 = vmatpush.msra.mxu0 %v364
    %1207 = vmatpush.msra.mxu0 %v360
    %1208 = vmatmul.f32.gmra.mxu0 %v1166
    %v1209 = vpop.f32.mrf.mxu0
    %v1210 = vadd.f32 0.0, %v1209
    %1211 = vdwg.mxu0
    %1212 = vmatpush.msra.mxu0 %v421
    %1213 = vmatpush.msra.mxu0 %v417
    %1214 = vmatpush.msra.mxu0 %v413
    %1215 = vmatpush.msra.mxu0 %v409
    %1216 = vmatpush.msra.mxu0 %v405
    %1217 = vmatpush.msra.mxu0 %v401
    %1218 = vmatpush.msra.mxu0 %v397
    %1219 = vmatpush.msra.mxu0 %v393
    %1220 = vmatpush.msra.mxu0 %v389
    %1221 = vmatpush.msra.mxu0 %v385
    %1222 = vmatpush.msra.mxu0 %v381
    %1223 = vmatpush.msra.mxu0 %v377
    %1224 = vmatpush.msra.mxu0 %v373
    %1225 = vmatpush.msra.mxu0 %v369
    %1226 = vmatpush.msra.mxu0 %v365
    %1227 = vmatpush.msra.mxu0 %v361
    %1228 = vmatmul.f32.gmra.mxu0 %v1166
    %v1229 = vpop.f32.mrf.mxu0
    %v1230 = vadd.f32 0.0, %v1229
    %1231 = vdwg.mxu0
    %1232 = vmatpush.msra.mxu0 %v422
    %1233 = vmatpush.msra.mxu0 %v418
    %1234 = vmatpush.msra.mxu0 %v414
    %1235 = vmatpush.msra.mxu0 %v410
    %1236 = vmatpush.msra.mxu0 %v406
    %1237 = vmatpush.msra.mxu0 %v402
    %1238 = vmatpush.msra.mxu0 %v398
    %1239 = vmatpush.msra.mxu0 %v394
    %1240 = vmatpush.msra.mxu0 %v390
    %1241 = vmatpush.msra.mxu0 %v386
    %1242 = vmatpush.msra.mxu0 %v382
    %1243 = vmatpush.msra.mxu0 %v378
    %1244 = vmatpush.msra.mxu0 %v374
    %1245 = vmatpush.msra.mxu0 %v370
    %1246 = vmatpush.msra.mxu0 %v366
    %1247 = vmatpush.msra.mxu0 %v362
    %1248 = vmatmul.f32.gmra.mxu0 %v1166
    %v1249 = vpop.f32.mrf.mxu0
    %v1250 = vadd.f32 0.0, %v1249
    %1251 = vdwg.mxu0
    %v1252 = vadd.f32 %v1168, %v1190
    %v1253 = vadd.f32 %v1169, %v1210
    %v1254 = vadd.f32 %v1170, %v1230
    %v1255 = vadd.f32 %v1171, %v1250
    %v1256 = vmul.f32 %v1252, 0.5
    %v1257 = vtanh.pop %v1256
    %v1258 = vmul.f32 %v1257, 0.5
    %v1259 = vadd.f32 %v1258, 0.5
    %v1260 = vmul.f32 %v1253, 0.5
    %v1261 = vtanh.pop %v1260
    %v1262 = vmul.f32 %v1261, 0.5
    %v1263 = vadd.f32 %v1262, 0.5
    %v1264 = vtanh.pop %v1254
    %v1265 = vmul.f32 %v1255, 0.5
    %v1266 = vtanh.pop %v1265
    %v1267 = vmul.f32 %v1266, 0.5
    %v1268 = vadd.f32 %v1267, 0.5
    %v1269 = vmul.f32 %v1263, %v1164
    %v1270 = vmul.f32 %v1259, %v1264
    %v1271 = vadd.f32 %v1269, %v1270
    %v1272 = vtanh.pop %v1271
    %v1273 = vmul.f32 %v1268, %v1272
    %1274 = vst [vmem:[#allocation2] sm:$0xff] %v1273
    %1275 = vst [vmem:[#allocation3] sm:$0xff] %v1271
    // Predicated region
    $region50: #{tpu_custom_call.1} parent=1 // pred_check
      %p1276 = pneg %p100
    $region51: #{tpu_custom_call.1} parent=1 // pred_check_branch
      %1278 = sbr.rel (%p1276) target = $region53
    $region52: #{tpu_custom_call.1} parent=1 // pred_region
      %v1279 = vld [vmem:[#allocation13] sm:$0xff]
      %v1280 = vld [vmem:[#allocation13 + $0x8] sm:$0xff]
      %v1281 = vld [vmem:[#allocation13 + $0x10] sm:$0xff]
      %v1282 = vld [vmem:[#allocation13 + $0x18] sm:$0xff]
      %v1283 = vld [vmem:[#allocation13 + $0x20] sm:$0xff]
      %v1284 = vld [vmem:[#allocation13 + $0x28] sm:$0xff]
      %v1285 = vld [vmem:[#allocation13 + $0x30] sm:$0xff]
      %v1286 = vld [vmem:[#allocation13 + $0x38] sm:$0xff]
      %v1287 = vld [vmem:[#allocation13 + $0x40] sm:$0xff]
      %v1288 = vld [vmem:[#allocation13 + $0x48] sm:$0xff]
      %v1289 = vld [vmem:[#allocation13 + $0x50] sm:$0xff]
      %v1290 = vld [vmem:[#allocation13 + $0x58] sm:$0xff]
      %v1291 = vld [vmem:[#allocation13 + $0x60] sm:$0xff]
      %v1292 = vld [vmem:[#allocation13 + $0x68] sm:$0xff]
      %v1293 = vld [vmem:[#allocation13 + $0x70] sm:$0xff]
      %v1294 = vld [vmem:[#allocation13 + $0x78] sm:$0xff]
      %v1295 = vld [vmem:[%s5] sm:$0x1]
      %v1297 = vperm.slane %v1295, 0
      %1299 = vmatpush.msra.mxu0 %v1294
      %1300 = vmatpush.msra.mxu0 %v1293
      %1301 = vmatpush.msra.mxu0 %v1292
      %1302 = vmatpush.msra.mxu0 %v1291
      %1303 = vmatpush.msra.mxu0 %v1290
      %1304 = vmatpush.msra.mxu0 %v1289
      %1305 = vmatpush.msra.mxu0 %v1288
      %1306 = vmatpush.msra.mxu0 %v1287
      %1307 = vmatpush.msra.mxu0 %v1286
      %1308 = vmatpush.msra.mxu0 %v1285
      %1309 = vmatpush.msra.mxu0 %v1284
      %1310 = vmatpush.msra.mxu0 %v1283
      %1311 = vmatpush.msra.mxu0 %v1282
      %1312 = vmatpush.msra.mxu0 %v1281
      %1313 = vmatpush.msra.mxu0 %v1280
      %1314 = vmatpush.msra.mxu0 %v1279
      %1315 = vmatmul.f32.gmra.mxu0 %v1273
      %v1316 = vpop.f32.mrf.mxu0
      %v1317 = vadd.f32 %v1297, %v1316
      %1318 = vdwg.mxu0
      %1319 = vst [vmem:[#allocation14] sm:$0xff] %v1317
    $region53: #{tpu_custom_call.1} parent=1 // pred_fallthru
      _
    // Predicated region
    $region54: #{tpu_custom_call.1} parent=1 // pred_check
      _
    $region55: #{tpu_custom_call.1} parent=1 // pred_check_branch
      %1321 = sbr.rel (0) target = $region57
    $region56: #{tpu_custom_call.1} parent=1 // pred_region
      %1323 = vsyncadd [#allocation7], 0
      %s1325 = sshll.u32 [#allocation14], 4
      %s1326 = int_to_ptr.vmem [resolvable:$true] %s1325
      %s1327 = sshll.u32 %s6, 4
      %s1328 = int_to_ptr.hbm [resolvable:$true] %s1327
      %1330 = dma.vmem_to_hbm [thread:$0]  %s1326, 128, %s1328, [#allocation7]
    $region57: #{tpu_custom_call.1} parent=1 // pred_fallthru
      _
    // Predicated region
    $region58: #{tpu_custom_call.1} parent=1 // pred_check
      _
    $region59: #{tpu_custom_call.1} parent=1 // pred_check_branch
      %1332 = sbr.rel (0) target = $region61
    $region60: #{tpu_custom_call.1} parent=1 // pred_region
      %1334 = dma.done [#allocation7], 128
    $region61: #{tpu_custom_call.1} parent=1 // pred_fallthru
      _
    %1335 = vsyncpa [#allocation6], 1
    %1336 = vsyncpa [#allocation9], 1
    %1337 = vsyncpa [#allocation12], 1
    %1338 = vsyncpa [#allocation7], 1

</llo_original>
